<compile_context>
chip_gen: v6e
topology: v6e:2x2x1
jax: 0.10.0
libtpu: 0.0.40
codegen_flags: <defaults>
</compile_context>

<pallas_src>
import functools

import jax
import jax.numpy as jnp
from jax.experimental import pallas as pl
from jax.experimental.pallas import tpu as pltpu


def _round_up(x, m):
    return ((x + m - 1) // m) * m


def choose_fold(batch, out_dim):
    """Fold factor that makes the output lane-dense (last dim == 128) if possible."""
    if out_dim < 128 and 128 % out_dim == 0:
        f = 128 // out_dim
        if batch % f == 0:
            return f
    return 1


def pack_cajal_params(weights, biases, fold):
    """Pack all layers into one padded bf16 weight buffer + one f32 bias buffer.

    weights[i]: [in_i, out_i] (pre-transposed vs torch's [out, in]).
    biases[i]:  [1, out_i].
    Each weight is expanded to its batch-folded block-diagonal form
    kron(eye(fold), W) so the kernel can work on lane-dense folded activations.
    Call ONCE and reuse (do not re-pack per forward).
    """
    n_lin = len(weights)
    f_in = [fold * w.shape[0] for w in weights]
    f_out = [fold * w.shape[1] for w in weights]
    max_fin = _round_up(max(f_in), 8)      # sublane alignment
    max_fout = _round_up(max(f_out), 128)  # lane alignment

    w_packed = jnp.zeros((n_lin, max_fin, max_fout), dtype=jnp.bfloat16)
    b_packed = jnp.zeros((n_lin, max_fout), dtype=jnp.float32)
    eye = jnp.eye(fold, dtype=jnp.float32)
    for li, (w, b) in enumerate(zip(weights, biases)):
        w_bd = jnp.kron(eye, w.astype(jnp.float32)).astype(jnp.bfloat16)
        b_t = jnp.tile(b.reshape(-1).astype(jnp.float32), (fold,))
        w_packed = w_packed.at[li, : f_in[li], : f_out[li]].set(w_bd)
        b_packed = b_packed.at[li, : f_out[li]].set(b_t)
    return w_packed, b_packed


def _cajal_kernel(layer_dims, fold, min_val, max_val,
                  x_ref, w_ref, b_ref, o_ref):
    """x_ref: (TBf, fold*in_dim) f32 (batch-folded)
       w_ref: (n_lin, max_fin, max_fout) bf16, block-diagonal, zero padded
       b_ref: (n_lin, max_fout) f32, tiled biases, zero padded
       o_ref: (TBf, fold*out_dim) f32 (lane-dense when fold*out_dim == 128)
    """
    n_lin = len(layer_dims) - 1
    h = x_ref[...].astype(jnp.float32)
    for li in range(n_lin):
        fin = fold * layer_dims[li]
        fout = fold * layer_dims[li + 1]
        w = w_ref[li, :fin, :fout]                 # bf16, static slice
        b = b_ref[li:li + 1, :fout]                # (1, fout) f32
        acc = jnp.dot(h.astype(jnp.bfloat16), w,
                      preferred_element_type=jnp.float32)  # MXU bf16, f32 acc
        h = acc + b                                # bias / ReLU / clamp in f32
        if li < n_lin - 1:
            h = jnp.maximum(h, 0.0)
    h = jnp.clip(h, min_val, max_val)
    o_ref[...] = h.astype(o_ref.dtype)


def cajal_forward(x, w_packed, b_packed, layer_dims, fold, min_val, max_val,
                  *, block_rows=1024, dropout_rate=0.0, training=False):
    """x: [B, layer_dims[0]] f32. Returns [B, layer_dims[-1]] f32."""
    if training and dropout_rate > 0.0:
        # TODO(synk): training-mode dropout (prng mask) not implemented.
        raise NotImplementedError("Cajal Pallas kernel is inference-only (no dropout).")

    B, in_dim = x.shape
    assert in_dim == layer_dims[0]
    out_dim = layer_dims[-1]
    assert B % fold == 0, "batch must be divisible by the fold factor"

    Bf = B // fold
    fin0 = fold * in_dim
    fout_last = fold * out_dim

    # Free (row-major, metadata-only) fold of batch into the lane axis.
    xf = x.reshape(Bf, fin0)

    # Batch tile: ~block_rows original rows per grid step, folded & 8-aligned.
    tbf = max(8, (block_rows // fold) // 8 * 8)
    tbf = min(tbf, Bf)
    if Bf % tbf != 0:
        tbf = Bf  # fallback to a single block
        # TODO(synk): ragged last block via cdiv grid + masked tail.

    grid = (Bf // tbf,)
    kernel = functools.partial(_cajal_kernel, tuple(layer_dims), fold,
                               float(min_val), float(max_val))

    out_f = pl.pallas_call(
        kernel,
        out_shape=jax.ShapeDtypeStruct((Bf, fout_last), x.dtype),
        grid=grid,
        in_specs=[
            pl.BlockSpec((tbf, fin0), lambda i: (i, 0)),        # x tile (pipelined)
            pl.BlockSpec(w_packed.shape, lambda i: (0, 0, 0)),  # weights VMEM-resident
            pl.BlockSpec(b_packed.shape, lambda i: (0, 0)),     # biases VMEM-resident
        ],
        out_specs=pl.BlockSpec((tbf, fout_last), lambda i: (i, 0)),
        compiler_params=pltpu.CompilerParams(
            dimension_semantics=("parallel",)),                 # megacore on v7x
    )(xf, w_packed, b_packed)

    # Free unfold back to [B, out_dim].
    return out_f.reshape(B, out_dim)


def reference_forward(x, weights, biases, min_val, max_val):
    """Pure-JAX reference with the same numerics (bf16 MXU operands, f32 accum)."""
    h = x
    for i, (w, b) in enumerate(zip(weights, biases)):
        h = jnp.dot(h.astype(jnp.bfloat16), w.astype(jnp.bfloat16),
                    preferred_element_type=jnp.float32) + b.astype(jnp.float32)
        if i < len(weights) - 1:
            h = jnp.maximum(h, 0.0)
    return jnp.clip(h, min_val, max_val)


if __name__ == "__main__":
    # Hyperparameters implied by Cajal.__init__
    input_shape = 16
    layer_shapes = [32, 32]   # hp.layer_shapes, hp.n_layers = 2
    output_shape = 8
    min_val, max_val = -1.0, 1.0
    batch = 2048              # large enough to exercise the batch-tiled grid

    dims = [input_shape] + layer_shapes + [output_shape]
    n_lin = len(dims) - 1

    key = jax.random.PRNGKey(0)
    keys = jax.random.split(key, 2 * n_lin + 1)
    weights, biases = [], []
    for li in range(n_lin):
        in_d, out_d = dims[li], dims[li + 1]
        weights.append(jax.random.normal(keys[2 * li], (in_d, out_d), dtype=jnp.float32) * 0.1)
        biases.append(jax.random.normal(keys[2 * li + 1], (1, out_d), dtype=jnp.float32) * 0.1)
    x = jax.random.normal(keys[-1], (batch, input_shape), dtype=jnp.float32)

    fold = choose_fold(batch, output_shape)                 # 16 -> 128-lane output
    w_packed, b_packed = pack_cajal_params(weights, biases, fold)

    out = cajal_forward(x, w_packed, b_packed, dims, fold, min_val, max_val)
    out = jax.block_until_ready(out)

    ref = reference_forward(x, weights, biases, min_val, max_val)
    assert out.shape == (batch, output_shape)
    max_err = float(jnp.max(jnp.abs(out - ref)))
    assert jnp.allclose(out, ref, atol=1e-4, rtol=1e-4), f"mismatch vs reference: {max_err}"

    print("KERNEL_OK")
</pallas_src>

<mosaic_0001>
module attributes {stable_mosaic.version = 11 : i64} {
  func.func @_cajal_kernel(%arg0: i32, %arg1: memref<64x256xf32, #tpu.memory_space<vmem>>, %arg2: memref<3x512x512xbf16, #tpu.memory_space<vmem>>, %arg3: memref<3x512xf32, #tpu.memory_space<vmem>>, %arg4: memref<64x128xf32, #tpu.memory_space<vmem>>) attributes {dimension_semantics = [#tpu.dimension_semantics<parallel>], iteration_bounds = array<i64: 2>, scalar_prefetch = 0 : i64, scratch_operands = 0 : i64, tpu.core_type = #tpu.core_type<tc>, window_params = [{transform_indices = @transform_0, window_bounds = array<i64: 64, 256>}, {pipeline_mode = #tpu.pipeline_mode<synchronous>, transform_indices = @transform_1, window_bounds = array<i64: 3, 512, 512>}, {pipeline_mode = #tpu.pipeline_mode<synchronous>, transform_indices = @transform_2, window_bounds = array<i64: 3, 512>}, {transform_indices = @transform_3, window_bounds = array<i64: 64, 128>}]} {
    %c0 = arith.constant 0 : index
    %c0_0 = arith.constant 0 : index
    %0 = vector.load %arg1[%c0, %c0_0] : memref<64x256xf32, #tpu.memory_space<vmem>>, vector<64x256xf32>
    %c0_1 = arith.constant 0 : index
    %c0_2 = arith.constant 0 : index
    %c0_3 = arith.constant 0 : index
    %1 = vector.load %arg2[%c0_1, %c0_2, %c0_3] : memref<3x512x512xbf16, #tpu.memory_space<vmem>>, vector<1x256x512xbf16>
    %2 = vector.shape_cast %1 : vector<1x256x512xbf16> to vector<256x512xbf16>
    %c0_4 = arith.constant 0 : index
    %c0_5 = arith.constant 0 : index
    %3 = vector.load %arg3[%c0_4, %c0_5] : memref<3x512xf32, #tpu.memory_space<vmem>>, vector<1x512xf32>
    %4 = arith.truncf %0 : vector<64x256xf32> to vector<64x256xbf16>
    %cst = arith.constant dense<0.000000e+00> : vector<64x512xf32>
    %5 = tpu.matmul %4, %2, %cst {dimension_numbers = #tpu.dot_dimension_numbers<[1], [0], [0], [1], [0, 0, 1, 1], [], []>} : vector<64x256xbf16>, vector<256x512xbf16>, vector<64x512xf32> -> vector<64x512xf32>
    %6 = vector.broadcast %3 : vector<1x512xf32> to vector<64x512xf32>
    %7 = arith.addf %5, %6 : vector<64x512xf32>
    %cst_6 = arith.constant 0.000000e+00 : f32
    %8 = vector.broadcast %cst_6 : f32 to vector<64x512xf32>
    %9 = arith.maximumf %7, %8 : vector<64x512xf32>
    %c1 = arith.constant 1 : index
    %c0_7 = arith.constant 0 : index
    %c0_8 = arith.constant 0 : index
    %10 = vector.load %arg2[%c1, %c0_7, %c0_8] : memref<3x512x512xbf16, #tpu.memory_space<vmem>>, vector<1x512x512xbf16>
    %11 = vector.shape_cast %10 : vector<1x512x512xbf16> to vector<512x512xbf16>
    %c1_9 = arith.constant 1 : index
    %c0_10 = arith.constant 0 : index
    %12 = vector.load %arg3[%c1_9, %c0_10] : memref<3x512xf32, #tpu.memory_space<vmem>>, vector<1x512xf32>
    %13 = arith.truncf %9 : vector<64x512xf32> to vector<64x512xbf16>
    %cst_11 = arith.constant dense<0.000000e+00> : vector<64x512xf32>
    %14 = tpu.matmul %13, %11, %cst_11 {dimension_numbers = #tpu.dot_dimension_numbers<[1], [0], [0], [1], [0, 0, 1, 1], [], []>} : vector<64x512xbf16>, vector<512x512xbf16>, vector<64x512xf32> -> vector<64x512xf32>
    %15 = vector.broadcast %12 : vector<1x512xf32> to vector<64x512xf32>
    %16 = arith.addf %14, %15 : vector<64x512xf32>
    %cst_12 = arith.constant 0.000000e+00 : f32
    %17 = vector.broadcast %cst_12 : f32 to vector<64x512xf32>
    %18 = arith.maximumf %16, %17 : vector<64x512xf32>
    %c2 = arith.constant 2 : index
    %c0_13 = arith.constant 0 : index
    %c0_14 = arith.constant 0 : index
    %19 = vector.load %arg2[%c2, %c0_13, %c0_14] : memref<3x512x512xbf16, #tpu.memory_space<vmem>>, vector<1x512x128xbf16>
    %20 = vector.shape_cast %19 : vector<1x512x128xbf16> to vector<512x128xbf16>
    %c2_15 = arith.constant 2 : index
    %c0_16 = arith.constant 0 : index
    %21 = vector.load %arg3[%c2_15, %c0_16] : memref<3x512xf32, #tpu.memory_space<vmem>>, vector<1x128xf32>
    %22 = arith.truncf %18 : vector<64x512xf32> to vector<64x512xbf16>
    %cst_17 = arith.constant dense<0.000000e+00> : vector<64x128xf32>
    %23 = tpu.matmul %22, %20, %cst_17 {dimension_numbers = #tpu.dot_dimension_numbers<[1], [0], [0], [1], [0, 0, 1, 1], [], []>} : vector<64x512xbf16>, vector<512x128xbf16>, vector<64x128xf32> -> vector<64x128xf32>
    %24 = vector.broadcast %21 : vector<1x128xf32> to vector<64x128xf32>
    %25 = arith.addf %23, %24 : vector<64x128xf32>
    %cst_18 = arith.constant -1.000000e+00 : f32
    %cst_19 = arith.constant 1.000000e+00 : f32
    %26 = vector.broadcast %cst_18 : f32 to vector<64x128xf32>
    %27 = arith.maximumf %26, %25 : vector<64x128xf32>
    %28 = vector.broadcast %cst_19 : f32 to vector<64x128xf32>
    %29 = arith.minimumf %28, %27 : vector<64x128xf32>
    %c0_20 = arith.constant 0 : index
    %c0_21 = arith.constant 0 : index
    %30 = vector.load %arg4[%c0_20, %c0_21] : memref<64x128xf32, #tpu.memory_space<vmem>>, vector<64x128xf32>
    tpu.vector_store %arg4[%c0_20, %c0_21], %29 {strides = array<i32>} : memref<64x128xf32, #tpu.memory_space<vmem>>, vector<64x128xf32>,
    return
  }
  func.func @transform_0(%arg0: i32) -> (i32, i32) {
    %c0_i32 = arith.constant 0 : i32
    %c0_i32_0 = arith.constant 0 : i32
    return %arg0, %c0_i32 : i32, i32
  }
  func.func @transform_1(%arg0: i32) -> (i32, i32, i32) {
    %c0_i32 = arith.constant 0 : i32
    %c0_i32_0 = arith.constant 0 : i32
    %c0_i32_1 = arith.constant 0 : i32
    %c0_i32_2 = arith.constant 0 : i32
    return %c0_i32, %c0_i32_0, %c0_i32_1 : i32, i32, i32
  }
  func.func @transform_2(%arg0: i32) -> (i32, i32) {
    %c0_i32 = arith.constant 0 : i32
    %c0_i32_0 = arith.constant 0 : i32
    %c0_i32_1 = arith.constant 0 : i32
    return %c0_i32, %c0_i32_0 : i32, i32
  }
  func.func @transform_3(%arg0: i32) -> (i32, i32) {
    %c0_i32 = arith.constant 0 : i32
    %c0_i32_0 = arith.constant 0 : i32
    return %arg0, %c0_i32 : i32, i32
  }
}

</mosaic_0001>

<llo_original>
// kernel: tpu_custom_call.1
$region0: #{tpu_custom_call.1}
  #allocation0 [shape = 'u32[]', space=smem, size = 0x4, offset = 0x4, fixed_abs, tag = 'smem constant byte address 0x4 - core index']
  #allocation1 [shape = 'u32[144,128]{1,0:T(1,128)}', space=vmem, size = 0x12000, scoped, tag = 'internal scratch']
  %s0 = inlined_call_operand.hbm [shape: f32[128,256], index: 0, kind: input, shape index: {}]
  %s1 = inlined_call_operand.hbm [shape: bf16[3,512,512], index: 1, kind: input, shape index: {}]
  %s2 = inlined_call_operand.hbm [shape: f32[3,512], index: 2, kind: input, shape index: {}]
  %s3 = inlined_call_operand.hbm [shape: f32[128,128], index: 3, kind: output, shape index: {}]
  %s4 = sld [smem:[#allocation0]]
  $region57: #{tpu_custom_call.1} parent=0
    _
  %s6 = ssub.s32 1, %s4
  %s7 = scalar_select 0, %s6, %s4
  $region1: #{tpu_custom_call.1} parent=0
    #allocation2 [shape = 'u8[131072]{0}', space=vmem, size = 0x20000, scoped, tag = 'input window, operand 0']
    #allocation3 [shape = 's32[2]{0}', space=sflag, size = 0x8, scoped, tag = 'scoped memory for tpu_custom_call.1']
    #allocation4 [shape = 's32[2]{0}', space=sflag, size = 0x8, scoped, tag = 'scoped memory for tpu_custom_call.1']
    #allocation5 [shape = 'u8[1572864]{0}', space=vmem, size = 0x180000, scoped, tag = 'input window, operand 1, single buffered']
    #allocation6 [shape = 's32[1]{0}', space=sflag, size = 0x4, scoped, tag = 'scoped memory for tpu_custom_call.1']
    #allocation7 [shape = 'u8[8192]{0}', space=vmem, size = 0x2000, scoped, tag = 'input window, operand 2, single buffered']
    #allocation8 [shape = 'u8[65536]{0}', space=vmem, size = 0x10000, scoped, tag = 'output window, operand 0']
    %8 = vsyncpa [#allocation3], 0
    %s9 = scalar_lea.sflag [#allocation3], 1
    %10 = vsyncpa %s9, 0
    %11 = vsyncpa [#allocation6], 0
    %12 = vsyncpa [#allocation4], 0
    %s13 = scalar_lea.sflag [#allocation4], 1
    %14 = vsyncpa %s13, 0
    loop: start=0, step=1, limit=4
    $region2: #{tpu_custom_call.1} parent=1 // loop_pre_header
      _
    $region3: #{tpu_custom_call.1} parent=1 // loop_header
      %s16 = sphi 0, %s20
      %p17 = scmp.ge.s32.totalorder %s16, 4
      %s26 = sphi 0, %s28
      %s29 = sphi 0, %s26
      %s30 = sphi 0, %s29
      %s46 = sphi 0, %s30
      %s50 = sphi 0, %s50
      %s52 = sphi 0, %s50
      %s53 = sphi 0, %s52
      %s67 = sphi 0, %s53
      %s71 = sphi 0, %s71
      %s73 = sphi 0, %s71
      %s74 = sphi 0, %s73
      %s88 = sphi 0, %s74
      %s94 = sphi 0, %s96
      %s97 = sphi 0, %s94
      %s98 = sphi 0, %s97
      %s114 = sphi 0, %s98
    $region4: #{tpu_custom_call.1} parent=1 // loop_header_branch
      %19 = sbr.rel (%p17) target = $region8
    $region5: #{tpu_custom_call.1} parent=1 // loop_body
      %s21 = ssub.s32 %s16, 1
      %s22 = ssub.s32 %s16, 2
      %s23 = sadd.s32 %s16, 1
      %s24 = ssub.s32 %s16, %s23
      %p25 = scmp.eq.s32.totalorder %s24, 0
      %s27 = sadd.s32 %s26, 1
      %s28 = scalar_select %p25, %s26, %s27
      %p31 = pneg %p25
      %p32 = scmp.eq.s32.totalorder %s16, 1
      %p33 = por %p31, %p32
      %p34 = scmp.ne.s32.totalorder %s26, %s29
      %p35 = scmp.eq.s32.totalorder %s16, 0
      %p36 = por %p34, %p35
      %p37 = scmp.ne.s32.totalorder %s26, %s29
      %p38 = scmp.eq.s32.totalorder %s21, 1
      %p39 = por %p37, %p38
      %p40 = scmp.ne.s32.totalorder %s29, %s30
      %p41 = scmp.eq.s32.totalorder %s21, 0
      %p42 = por %p40, %p41
      %p43 = scmp.ne.s32.totalorder %s29, %s30
      %p44 = scmp.eq.s32.totalorder %s22, 1
      %p45 = por %p43, %p44
      %p47 = scmp.ne.s32.totalorder %s30, %s46
      %p48 = scmp.eq.s32.totalorder %s22, 0
      %p49 = por %p47, %p48
      %s51 = sadd.s32 %s50, 1
      %p54 = scmp.eq.s32.totalorder %s16, 1
      %p55 = scmp.ne.s32.totalorder %s50, %s52
      %p56 = scmp.eq.s32.totalorder %s16, 0
      %p57 = por %p55, %p56
      %p58 = scmp.ne.s32.totalorder %s50, %s52
      %p59 = scmp.eq.s32.totalorder %s21, 1
      %p60 = por %p58, %p59
      %p61 = scmp.ne.s32.totalorder %s52, %s53
      %p62 = scmp.eq.s32.totalorder %s21, 0
      %p63 = por %p61, %p62
      %p64 = scmp.ne.s32.totalorder %s52, %s53
      %p65 = scmp.eq.s32.totalorder %s22, 1
      %p66 = por %p64, %p65
      %p68 = scmp.ne.s32.totalorder %s53, %s67
      %p69 = scmp.eq.s32.totalorder %s22, 0
      %p70 = por %p68, %p69
      %s72 = sadd.s32 %s71, 1
      %p75 = scmp.eq.s32.totalorder %s16, 1
      %p76 = scmp.ne.s32.totalorder %s71, %s73
      %p77 = scmp.eq.s32.totalorder %s16, 0
      %p78 = por %p76, %p77
      %p79 = scmp.ne.s32.totalorder %s71, %s73
      %p80 = scmp.eq.s32.totalorder %s21, 1
      %p81 = por %p79, %p80
      %p82 = scmp.ne.s32.totalorder %s73, %s74
      %p83 = scmp.eq.s32.totalorder %s21, 0
      %p84 = por %p82, %p83
      %p85 = scmp.ne.s32.totalorder %s73, %s74
      %p86 = scmp.eq.s32.totalorder %s22, 1
      %p87 = por %p85, %p86
      %p89 = scmp.ne.s32.totalorder %s74, %s88
      %p90 = scmp.eq.s32.totalorder %s22, 0
      %p91 = por %p89, %p90
      %s92 = ssub.s32 %s16, %s23
      %p93 = scmp.eq.s32.totalorder %s92, 0
      %s95 = sadd.s32 %s94, 1
      %s96 = scalar_select %p93, %s94, %s95
      %p99 = pneg %p93
      %p100 = scmp.eq.s32.totalorder %s16, 1
      %p101 = por %p99, %p100
      %p102 = scmp.ne.s32.totalorder %s94, %s97
      %p103 = scmp.eq.s32.totalorder %s16, 0
      %p104 = por %p102, %p103
      %p105 = scmp.ne.s32.totalorder %s94, %s97
      %p106 = scmp.eq.s32.totalorder %s21, 1
      %p107 = por %p105, %p106
      %p108 = scmp.ne.s32.totalorder %s97, %s98
      %p109 = scmp.eq.s32.totalorder %s21, 0
      %p110 = por %p108, %p109
      %p111 = scmp.ne.s32.totalorder %s97, %s98
      %p112 = scmp.eq.s32.totalorder %s22, 1
      %p113 = por %p111, %p112
      %p115 = scmp.ne.s32.totalorder %s98, %s114
      %p116 = scmp.eq.s32.totalorder %s22, 0
      %p117 = por %p115, %p116
      %p118 = scmp.le.s32.totalorder 1, %s16
      %p119 = scmp.lt.s32.totalorder %s16, 3
      %p120 = pnand %p118, %p119
      %p121 = pneg %p120
      // Predicated region
      $region9: #{tpu_custom_call.1} parent=5 // pred_check
        _
      $region10: #{tpu_custom_call.1} parent=5 // pred_check_branch
        %123 = sbr.rel (%p120) target = $region12
      $region11: #{tpu_custom_call.1} parent=5 // pred_region
        %s124 = ssub.s32 %s16, 1
        // Predicated region
        $region13: #{tpu_custom_call.1} parent=11 // pred_check
          %p125 = pneg %p63
        $region14: #{tpu_custom_call.1} parent=11 // pred_check_branch
          %127 = sbr.rel (%p125) target = $region16
        $region15: #{tpu_custom_call.1} parent=11 // pred_region
          %s129 = ssub.s32 49152, 49152
          %130 = vsyncadd [#allocation6], %s129
          %s131 = sshll.u32 [#allocation5], 4
          %s132 = int_to_ptr.vmem [resolvable:$true] %s131
          %137 = dma.hbm_to_vmem [thread:$0]  %s1, 49152, %s132, [#allocation6], 256, 256, 16
        $region16: #{tpu_custom_call.1} parent=11 // pred_fallthru
          _
        // Predicated region
        $region17: #{tpu_custom_call.1} parent=11 // pred_check
          %p138 = pneg %p84
        $region18: #{tpu_custom_call.1} parent=11 // pred_check_branch
          %140 = sbr.rel (%p138) target = $region20
        $region19: #{tpu_custom_call.1} parent=11 // pred_region
          %s142 = ssub.s32 256, 256
          %143 = vsyncadd [#allocation6], %s142
          %s145 = sshll.u32 [#allocation7], 4
          %s146 = int_to_ptr.vmem [resolvable:$true] %s145
          %148 = dma.hbm_to_vmem [thread:$0]  %s2, 256, %s146, [#allocation6]
        $region20: #{tpu_custom_call.1} parent=11 // pred_fallthru
          _
      $region12: #{tpu_custom_call.1} parent=5 // pred_fallthru
        _
      %p149 = scmp.lt.s32.totalorder %s16, 2
      // Predicated region
      $region21: #{tpu_custom_call.1} parent=5 // pred_check
        %p150 = pneg %p149
      $region22: #{tpu_custom_call.1} parent=5 // pred_check_branch
        %152 = sbr.rel (%p150) target = $region24
      $region23: #{tpu_custom_call.1} parent=5 // pred_region
        // Predicated region
        $region25: #{tpu_custom_call.1} parent=23 // pred_check
          %p153 = pneg %p36
        $region26: #{tpu_custom_call.1} parent=23 // pred_check_branch
          %155 = sbr.rel (%p153) target = $region28
        $region27: #{tpu_custom_call.1} parent=23 // pred_region
          %s156 = sand.u32 %s26, 1
          %s157 = scalar_lea.sflag [#allocation3], %s156
          %s158 = sand.u32 %s26, 1
          %s159 = smul.addr %s158, 128
          %s160 = scalar_lea.vmem [#allocation2], %s159
          %s161 = smul.u32 8, %s16
          %s163 = ssub.s32 2048, 2048
          %164 = vsyncadd %s157, %s163
          %s165 = smul.addr %s161, 2
          %s166 = smul.addr %s165, 128
          %s167 = scalar_lea.hbm %s0, %s166
          %s168 = sshll.u32 %s160, 4
          %s169 = int_to_ptr.vmem [resolvable:$true] %s168
          %174 = dma.hbm_to_vmem [thread:$0]  %s167, 2048, %s169, %s157, 256, 256, 16
        $region28: #{tpu_custom_call.1} parent=23 // pred_fallthru
          _
      $region24: #{tpu_custom_call.1} parent=5 // pred_fallthru
        _
      %p175 = scmp.le.s32.totalorder 1, %s16
      %p176 = scmp.lt.s32.totalorder %s16, 3
      %p177 = pnand %p175, %p176
      %p178 = pneg %p177
      // Predicated region
      $region29: #{tpu_custom_call.1} parent=5 // pred_check
        _
      $region30: #{tpu_custom_call.1} parent=5 // pred_check_branch
        %180 = sbr.rel (%p177) target = $region32
      $region31: #{tpu_custom_call.1} parent=5 // pred_region
        %s181 = ssub.s32 %s16, 1
        %s182 = sand.u32 %s29, 1
        %s183 = scalar_lea.sflag [#allocation3], %s182
        %s184 = sand.u32 %s29, 1
        %s185 = smul.addr %s184, 128
        %s186 = scalar_lea.vmem [#allocation2], %s185
        // Predicated region
        $region33: #{tpu_custom_call.1} parent=31 // pred_check
          %p187 = pneg %p42
        $region34: #{tpu_custom_call.1} parent=31 // pred_check_branch
          %189 = sbr.rel (%p187) target = $region36
        $region35: #{tpu_custom_call.1} parent=31 // pred_region
          %190 = dma.done %s183, 2048
        $region36: #{tpu_custom_call.1} parent=31 // pred_fallthru
          _
        // Predicated region
        $region37: #{tpu_custom_call.1} parent=31 // pred_check
          %p191 = pneg %p63
        $region38: #{tpu_custom_call.1} parent=31 // pred_check_branch
          %193 = sbr.rel (%p191) target = $region40
        $region39: #{tpu_custom_call.1} parent=31 // pred_region
          %194 = dma.done [#allocation6], 49152
        $region40: #{tpu_custom_call.1} parent=31 // pred_fallthru
          _
        // Predicated region
        $region41: #{tpu_custom_call.1} parent=31 // pred_check
          %p195 = pneg %p84
        $region42: #{tpu_custom_call.1} parent=31 // pred_check_branch
          %197 = sbr.rel (%p195) target = $region44
        $region43: #{tpu_custom_call.1} parent=31 // pred_region
          %198 = dma.done [#allocation6], 256
        $region44: #{tpu_custom_call.1} parent=31 // pred_fallthru
          _
        %s199 = sand.u32 %s29, 1
        %s200 = scalar_lea.sflag [#allocation3], %s199
        %s201 = sand.u32 %s29, 1
        %s202 = smul.addr %s201, 128
        %s203 = scalar_lea.vmem [#allocation2], %s202
        %p204 = pneg %p42
        %p205 = pneg %p39
        %p206 = pneg %p63
        %p207 = pneg %p60
        %p208 = pneg %p84
        %p209 = pneg %p81
        %p210 = pneg %p110
        %p211 = pneg %p107
        %s212 = sand.u32 %s97, 1
        %s213 = scalar_lea.sflag [#allocation4], %s212
        %s214 = sand.u32 %s97, 1
        %s215 = smul.addr %s214, 64
        %s216 = scalar_lea.vmem [#allocation8], %s215
        %s217 = smul.u32 8, %s21
        %s218 = smul.u32 8, %s21
        %v220 = vld [vmem:[%s186] sm:$0xff]
        %v221 = vld [vmem:[%s186 + $0x8] sm:$0xff]
        %v222 = vld [vmem:[%s186 + $0x10] sm:$0xff]
        %v223 = vld [vmem:[%s186 + $0x18] sm:$0xff]
        %v224 = vld [vmem:[%s186 + $0x20] sm:$0xff]
        %v225 = vld [vmem:[%s186 + $0x28] sm:$0xff]
        %v226 = vld [vmem:[%s186 + $0x30] sm:$0xff]
        %v227 = vld [vmem:[%s186 + $0x38] sm:$0xff]
        %v228 = vld [vmem:[%s186 + $0x40] sm:$0xff]
        %v229 = vld [vmem:[%s186 + $0x48] sm:$0xff]
        %v230 = vld [vmem:[%s186 + $0x50] sm:$0xff]
        %v231 = vld [vmem:[%s186 + $0x58] sm:$0xff]
        %v232 = vld [vmem:[%s186 + $0x60] sm:$0xff]
        %v233 = vld [vmem:[%s186 + $0x68] sm:$0xff]
        %v234 = vld [vmem:[%s186 + $0x70] sm:$0xff]
        %v235 = vld [vmem:[%s186 + $0x78] sm:$0xff]
        %v236 = vld [vmem:[#allocation5] sm:$0xff]
        %v237 = vld [vmem:[#allocation5 + $0x8] sm:$0xff]
        %v238 = vld [vmem:[#allocation5 + $0x10] sm:$0xff]
        %v239 = vld [vmem:[#allocation5 + $0x18] sm:$0xff]
        %v240 = vld [vmem:[#allocation5 + $0x20] sm:$0xff]
        %v241 = vld [vmem:[#allocation5 + $0x28] sm:$0xff]
        %v242 = vld [vmem:[#allocation5 + $0x30] sm:$0xff]
        %v243 = vld [vmem:[#allocation5 + $0x38] sm:$0xff]
        %v244 = vld [vmem:[#allocation5 + $0x40] sm:$0xff]
        %v245 = vld [vmem:[#allocation5 + $0x48] sm:$0xff]
        %v246 = vld [vmem:[#allocation5 + $0x50] sm:$0xff]
        %v247 = vld [vmem:[#allocation5 + $0x58] sm:$0xff]
        %v248 = vld [vmem:[#allocation5 + $0x60] sm:$0xff]
        %v249 = vld [vmem:[#allocation5 + $0x68] sm:$0xff]
        %v250 = vld [vmem:[#allocation5 + $0x70] sm:$0xff]
        %v251 = vld [vmem:[#allocation5 + $0x78] sm:$0xff]
        %v252 = vld [vmem:[#allocation5 + $0x80] sm:$0xff]
        %v253 = vld [vmem:[#allocation5 + $0x88] sm:$0xff]
        %v254 = vld [vmem:[#allocation5 + $0x90] sm:$0xff]
        %v255 = vld [vmem:[#allocation5 + $0x98] sm:$0xff]
        %v256 = vld [vmem:[#allocation5 + $0xa0] sm:$0xff]
        %v257 = vld [vmem:[#allocation5 + $0xa8] sm:$0xff]
        %v258 = vld [vmem:[#allocation5 + $0xb0] sm:$0xff]
        %v259 = vld [vmem:[#allocation5 + $0xb8] sm:$0xff]
        %v260 = vld [vmem:[#allocation5 + $0xc0] sm:$0xff]
        %v261 = vld [vmem:[#allocation5 + $0xc8] sm:$0xff]
        %v262 = vld [vmem:[#allocation5 + $0xd0] sm:$0xff]
        %v263 = vld [vmem:[#allocation5 + $0xd8] sm:$0xff]
        %v264 = vld [vmem:[#allocation5 + $0xe0] sm:$0xff]
        %v265 = vld [vmem:[#allocation5 + $0xe8] sm:$0xff]
        %v266 = vld [vmem:[#allocation5 + $0xf0] sm:$0xff]
        %v267 = vld [vmem:[#allocation5 + $0xf8] sm:$0xff]
        %v268 = vld [vmem:[#allocation5 + $0x100] sm:$0xff]
        %v269 = vld [vmem:[#allocation5 + $0x108] sm:$0xff]
        %v270 = vld [vmem:[#allocation5 + $0x110] sm:$0xff]
        %v271 = vld [vmem:[#allocation5 + $0x118] sm:$0xff]
        %v272 = vld [vmem:[#allocation5 + $0x120] sm:$0xff]
        %v273 = vld [vmem:[#allocation5 + $0x128] sm:$0xff]
        %v274 = vld [vmem:[#allocation5 + $0x130] sm:$0xff]
        %v275 = vld [vmem:[#allocation5 + $0x138] sm:$0xff]
        %v276 = vld [vmem:[#allocation5 + $0x140] sm:$0xff]
        %v277 = vld [vmem:[#allocation5 + $0x148] sm:$0xff]
        %v278 = vld [vmem:[#allocation5 + $0x150] sm:$0xff]
        %v279 = vld [vmem:[#allocation5 + $0x158] sm:$0xff]
        %v280 = vld [vmem:[#allocation5 + $0x160] sm:$0xff]
        %v281 = vld [vmem:[#allocation5 + $0x168] sm:$0xff]
        %v282 = vld [vmem:[#allocation5 + $0x170] sm:$0xff]
        %v283 = vld [vmem:[#allocation5 + $0x178] sm:$0xff]
        %v284 = vld [vmem:[#allocation5 + $0x180] sm:$0xff]
        %v285 = vld [vmem:[#allocation5 + $0x188] sm:$0xff]
        %v286 = vld [vmem:[#allocation5 + $0x190] sm:$0xff]
        %v287 = vld [vmem:[#allocation5 + $0x198] sm:$0xff]
        %v288 = vld [vmem:[#allocation5 + $0x1a0] sm:$0xff]
        %v289 = vld [vmem:[#allocation5 + $0x1a8] sm:$0xff]
        %v290 = vld [vmem:[#allocation5 + $0x1b0] sm:$0xff]
        %v291 = vld [vmem:[#allocation5 + $0x1b8] sm:$0xff]
        %v292 = vld [vmem:[#allocation5 + $0x1c0] sm:$0xff]
        %v293 = vld [vmem:[#allocation5 + $0x1c8] sm:$0xff]
        %v294 = vld [vmem:[#allocation5 + $0x1d0] sm:$0xff]
        %v295 = vld [vmem:[#allocation5 + $0x1d8] sm:$0xff]
        %v296 = vld [vmem:[#allocation5 + $0x1e0] sm:$0xff]
        %v297 = vld [vmem:[#allocation5 + $0x1e8] sm:$0xff]
        %v298 = vld [vmem:[#allocation5 + $0x1f0] sm:$0xff]
        %v299 = vld [vmem:[#allocation5 + $0x1f8] sm:$0xff]
        %v300 = vld [vmem:[#allocation7] ss:$4 sm:$0xf]
        %v301 = vpack.c.bf16 %v222, %v220
        %v302 = vpack.c.bf16 %v223, %v221
        %v303 = vpack.c.bf16 %v226, %v224
        %v304 = vpack.c.bf16 %v227, %v225
        %v305 = vpack.c.bf16 %v230, %v228
        %v306 = vpack.c.bf16 %v231, %v229
        %v307 = vpack.c.bf16 %v234, %v232
        %v308 = vpack.c.bf16 %v235, %v233
        %v310 = vlaneseq
        %v311 = vshrl.u32 %v310, 7
        %v312 = vsub.s32 0, %v311
        %v313 = vrot.slane %v300, %v312
        %v314 = vlaneseq
        %v315 = vshrl.u32 %v314, 7
        %v316 = vsub.s32 1, %v315
        %v317 = vrot.slane %v300, %v316
        %v318 = vlaneseq
        %v319 = vshrl.u32 %v318, 7
        %v320 = vsub.s32 2, %v319
        %v321 = vrot.slane %v300, %v320
        %v322 = vlaneseq
        %v323 = vshrl.u32 %v322, 7
        %v324 = vsub.s32 3, %v323
        %v325 = vrot.slane %v300, %v324
        %v394 = vunpack.c.l.b16 %v236
        %v395 = vunpack.c.h.b16 %v236
        %v396 = vunpack.c.l.b16 %v237
        %v397 = vunpack.c.h.b16 %v237
        %v398 = vunpack.c.l.b16 %v238
        %v399 = vunpack.c.h.b16 %v238
        %v400 = vunpack.c.l.b16 %v239
        %v401 = vunpack.c.h.b16 %v239
        %v402 = vunpack.c.l.b16 %v240
        %v403 = vunpack.c.h.b16 %v240
        %v404 = vunpack.c.l.b16 %v241
        %v405 = vunpack.c.h.b16 %v241
        %v406 = vunpack.c.l.b16 %v242
        %v407 = vunpack.c.h.b16 %v242
        %v408 = vunpack.c.l.b16 %v243
        %v409 = vunpack.c.h.b16 %v243
        %v410 = vunpack.c.l.b16 %v244
        %v411 = vunpack.c.h.b16 %v244
        %v412 = vunpack.c.l.b16 %v245
        %v413 = vunpack.c.h.b16 %v245
        %v414 = vunpack.c.l.b16 %v246
        %v415 = vunpack.c.h.b16 %v246
        %v416 = vunpack.c.l.b16 %v247
        %v417 = vunpack.c.h.b16 %v247
        %v418 = vunpack.c.l.b16 %v248
        %v419 = vunpack.c.h.b16 %v248
        %v420 = vunpack.c.l.b16 %v249
        %v421 = vunpack.c.h.b16 %v249
        %v422 = vunpack.c.l.b16 %v250
        %v423 = vunpack.c.h.b16 %v250
        %v424 = vunpack.c.l.b16 %v251
        %v425 = vunpack.c.h.b16 %v251
        %v426 = vunpack.c.l.b16 %v252
        %v427 = vunpack.c.h.b16 %v252
        %v428 = vunpack.c.l.b16 %v253
        %v429 = vunpack.c.h.b16 %v253
        %v430 = vunpack.c.l.b16 %v254
        %v431 = vunpack.c.h.b16 %v254
        %v432 = vunpack.c.l.b16 %v255
        %v433 = vunpack.c.h.b16 %v255
        %v434 = vunpack.c.l.b16 %v256
        %v435 = vunpack.c.h.b16 %v256
        %v436 = vunpack.c.l.b16 %v257
        %v437 = vunpack.c.h.b16 %v257
        %v438 = vunpack.c.l.b16 %v258
        %v439 = vunpack.c.h.b16 %v258
        %v440 = vunpack.c.l.b16 %v259
        %v441 = vunpack.c.h.b16 %v259
        %v442 = vunpack.c.l.b16 %v260
        %v443 = vunpack.c.h.b16 %v260
        %v444 = vunpack.c.l.b16 %v261
        %v445 = vunpack.c.h.b16 %v261
        %v446 = vunpack.c.l.b16 %v262
        %v447 = vunpack.c.h.b16 %v262
        %v448 = vunpack.c.l.b16 %v263
        %v449 = vunpack.c.h.b16 %v263
        %v450 = vunpack.c.l.b16 %v264
        %v451 = vunpack.c.h.b16 %v264
        %v452 = vunpack.c.l.b16 %v265
        %v453 = vunpack.c.h.b16 %v265
        %v454 = vunpack.c.l.b16 %v266
        %v455 = vunpack.c.h.b16 %v266
        %v456 = vunpack.c.l.b16 %v267
        %v457 = vunpack.c.h.b16 %v267
        %v458 = vunpack.c.l.b16 %v268
        %v459 = vunpack.c.h.b16 %v268
        %v460 = vunpack.c.l.b16 %v269
        %v461 = vunpack.c.h.b16 %v269
        %v462 = vunpack.c.l.b16 %v270
        %v463 = vunpack.c.h.b16 %v270
        %v464 = vunpack.c.l.b16 %v271
        %v465 = vunpack.c.h.b16 %v271
        %v466 = vunpack.c.l.b16 %v272
        %v467 = vunpack.c.h.b16 %v272
        %v468 = vunpack.c.l.b16 %v273
        %v469 = vunpack.c.h.b16 %v273
        %v470 = vunpack.c.l.b16 %v274
        %v471 = vunpack.c.h.b16 %v274
        %v472 = vunpack.c.l.b16 %v275
        %v473 = vunpack.c.h.b16 %v275
        %v474 = vunpack.c.l.b16 %v276
        %v475 = vunpack.c.h.b16 %v276
        %v476 = vunpack.c.l.b16 %v277
        %v477 = vunpack.c.h.b16 %v277
        %v478 = vunpack.c.l.b16 %v278
        %v479 = vunpack.c.h.b16 %v278
        %v480 = vunpack.c.l.b16 %v279
        %v481 = vunpack.c.h.b16 %v279
        %v482 = vunpack.c.l.b16 %v280
        %v483 = vunpack.c.h.b16 %v280
        %v484 = vunpack.c.l.b16 %v281
        %v485 = vunpack.c.h.b16 %v281
        %v486 = vunpack.c.l.b16 %v282
        %v487 = vunpack.c.h.b16 %v282
        %v488 = vunpack.c.l.b16 %v283
        %v489 = vunpack.c.h.b16 %v283
        %v490 = vunpack.c.l.b16 %v284
        %v491 = vunpack.c.h.b16 %v284
        %v492 = vunpack.c.l.b16 %v285
        %v493 = vunpack.c.h.b16 %v285
        %v494 = vunpack.c.l.b16 %v286
        %v495 = vunpack.c.h.b16 %v286
        %v496 = vunpack.c.l.b16 %v287
        %v497 = vunpack.c.h.b16 %v287
        %v498 = vunpack.c.l.b16 %v288
        %v499 = vunpack.c.h.b16 %v288
        %v500 = vunpack.c.l.b16 %v289
        %v501 = vunpack.c.h.b16 %v289
        %v502 = vunpack.c.l.b16 %v290
        %v503 = vunpack.c.h.b16 %v290
        %v504 = vunpack.c.l.b16 %v291
        %v505 = vunpack.c.h.b16 %v291
        %v506 = vunpack.c.l.b16 %v292
        %v507 = vunpack.c.h.b16 %v292
        %v508 = vunpack.c.l.b16 %v293
        %v509 = vunpack.c.h.b16 %v293
        %v510 = vunpack.c.l.b16 %v294
        %v511 = vunpack.c.h.b16 %v294
        %v512 = vunpack.c.l.b16 %v295
        %v513 = vunpack.c.h.b16 %v295
        %v514 = vunpack.c.l.b16 %v296
        %v515 = vunpack.c.h.b16 %v296
        %v516 = vunpack.c.l.b16 %v297
        %v517 = vunpack.c.h.b16 %v297
        %v518 = vunpack.c.l.b16 %v298
        %v519 = vunpack.c.h.b16 %v298
        %v520 = vunpack.c.l.b16 %v299
        %v521 = vunpack.c.h.b16 %v299
        %v522 = vpack.c.b16 %v398, %v394
        %v523 = vpack.c.b16 %v399, %v395
        %v524 = vpack.c.b16 %v400, %v396
        %v525 = vpack.c.b16 %v401, %v397
        %v526 = vpack.c.b16 %v406, %v402
        %v527 = vpack.c.b16 %v407, %v403
        %v528 = vpack.c.b16 %v408, %v404
        %v529 = vpack.c.b16 %v409, %v405
        %v530 = vpack.c.b16 %v414, %v410
        %v531 = vpack.c.b16 %v415, %v411
        %v532 = vpack.c.b16 %v416, %v412
        %v533 = vpack.c.b16 %v417, %v413
        %v534 = vpack.c.b16 %v422, %v418
        %v535 = vpack.c.b16 %v423, %v419
        %v536 = vpack.c.b16 %v424, %v420
        %v537 = vpack.c.b16 %v425, %v421
        %v538 = vpack.c.b16 %v430, %v426
        %v539 = vpack.c.b16 %v431, %v427
        %v540 = vpack.c.b16 %v432, %v428
        %v541 = vpack.c.b16 %v433, %v429
        %v542 = vpack.c.b16 %v438, %v434
        %v543 = vpack.c.b16 %v439, %v435
        %v544 = vpack.c.b16 %v440, %v436
        %v545 = vpack.c.b16 %v441, %v437
        %v546 = vpack.c.b16 %v446, %v442
        %v547 = vpack.c.b16 %v447, %v443
        %v548 = vpack.c.b16 %v448, %v444
        %v549 = vpack.c.b16 %v449, %v445
        %v550 = vpack.c.b16 %v454, %v450
        %v551 = vpack.c.b16 %v455, %v451
        %v552 = vpack.c.b16 %v456, %v452
        %v553 = vpack.c.b16 %v457, %v453
        %v554 = vpack.c.b16 %v462, %v458
        %v555 = vpack.c.b16 %v463, %v459
        %v556 = vpack.c.b16 %v464, %v460
        %v557 = vpack.c.b16 %v465, %v461
        %v558 = vpack.c.b16 %v470, %v466
        %v559 = vpack.c.b16 %v471, %v467
        %v560 = vpack.c.b16 %v472, %v468
        %v561 = vpack.c.b16 %v473, %v469
        %v562 = vpack.c.b16 %v478, %v474
        %v563 = vpack.c.b16 %v479, %v475
        %v564 = vpack.c.b16 %v480, %v476
        %v565 = vpack.c.b16 %v481, %v477
        %v566 = vpack.c.b16 %v486, %v482
        %v567 = vpack.c.b16 %v487, %v483
        %v568 = vpack.c.b16 %v488, %v484
        %v569 = vpack.c.b16 %v489, %v485
        %v570 = vpack.c.b16 %v494, %v490
        %v571 = vpack.c.b16 %v495, %v491
        %v572 = vpack.c.b16 %v496, %v492
        %v573 = vpack.c.b16 %v497, %v493
        %v574 = vpack.c.b16 %v502, %v498
        %v575 = vpack.c.b16 %v503, %v499
        %v576 = vpack.c.b16 %v504, %v500
        %v577 = vpack.c.b16 %v505, %v501
        %v578 = vpack.c.b16 %v510, %v506
        %v579 = vpack.c.b16 %v511, %v507
        %v580 = vpack.c.b16 %v512, %v508
        %v581 = vpack.c.b16 %v513, %v509
        %v582 = vpack.c.b16 %v518, %v514
        %v583 = vpack.c.b16 %v519, %v515
        %v584 = vpack.c.b16 %v520, %v516
        %v585 = vpack.c.b16 %v521, %v517
        %650 = vmatprep.subr.bf16.mxu0 %v551
        %651 = vmatpush1.bf16.msra.mxu0 %v550
        %652 = vmatprep.subr.bf16.mxu0 %v547
        %653 = vmatpush1.bf16.msra.mxu0 %v546
        %654 = vmatprep.subr.bf16.mxu0 %v543
        %655 = vmatpush1.bf16.msra.mxu0 %v542
        %656 = vmatprep.subr.bf16.mxu0 %v539
        %657 = vmatpush1.bf16.msra.mxu0 %v538
        %658 = vmatprep.subr.bf16.mxu0 %v535
        %659 = vmatpush1.bf16.msra.mxu0 %v534
        %660 = vmatprep.subr.bf16.mxu0 %v531
        %661 = vmatpush1.bf16.msra.mxu0 %v530
        %662 = vmatprep.subr.bf16.mxu0 %v527
        %663 = vmatpush1.bf16.msra.mxu0 %v526
        %664 = vmatprep.subr.bf16.mxu0 %v523
        %665 = vmatpush1.bf16.msra.mxu0 %v522
        %666 = vmatprep.subr.bf16.mxu0 %v583
        %667 = vmatpush2.bf16.msra.mxu0 %v582
        %668 = vmatprep.subr.bf16.mxu0 %v579
        %669 = vmatpush2.bf16.msra.mxu0 %v578
        %670 = vmatprep.subr.bf16.mxu0 %v575
        %671 = vmatpush2.bf16.msra.mxu0 %v574
        %672 = vmatprep.subr.bf16.mxu0 %v571
        %673 = vmatpush2.bf16.msra.mxu0 %v570
        %674 = vmatprep.subr.bf16.mxu0 %v567
        %675 = vmatpush2.bf16.msra.mxu0 %v566
        %676 = vmatprep.subr.bf16.mxu0 %v563
        %677 = vmatpush2.bf16.msra.mxu0 %v562
        %678 = vmatprep.subr.bf16.mxu0 %v559
        %679 = vmatpush2.bf16.msra.mxu0 %v558
        %680 = vmatprep.subr.bf16.mxu0 %v555
        %681 = vmatpush2.bf16.msra.mxu0 %v554
        %682 = vmatprep.mubr.bf16.mxu0 %v302
        %683 = vmatmul.mubr.bf16.gmra.mxu0 %v301
        %v684 = vpop.f32.mrf.mxu0
        %v685 = vadd.f32 %v313, %v684
        %v686 = vpop.f32.mrf.mxu0
        %v687 = vadd.f32 %v317, %v686
        %v688 = vpop.f32.mrf.mxu0
        %v689 = vadd.f32 %v313, %v688
        %v690 = vpop.f32.mrf.mxu0
        %v691 = vadd.f32 %v317, %v690
        %692 = vmatprep.mubr.bf16.mxu0 %v304
        %693 = vmatmul.mubr.bf16.gmra.mxu0 %v303
        %v694 = vpop.f32.mrf.mxu0
        %v695 = vadd.f32 %v313, %v694
        %v696 = vpop.f32.mrf.mxu0
        %v697 = vadd.f32 %v317, %v696
        %v698 = vpop.f32.mrf.mxu0
        %v699 = vadd.f32 %v313, %v698
        %v700 = vpop.f32.mrf.mxu0
        %v701 = vadd.f32 %v317, %v700
        %702 = vmatprep.mubr.bf16.mxu0 %v306
        %703 = vmatmul.mubr.bf16.gmra.mxu0 %v305
        %v704 = vpop.f32.mrf.mxu0
        %v705 = vadd.f32 %v313, %v704
        %v706 = vpop.f32.mrf.mxu0
        %v707 = vadd.f32 %v317, %v706
        %v708 = vpop.f32.mrf.mxu0
        %v709 = vadd.f32 %v313, %v708
        %v710 = vpop.f32.mrf.mxu0
        %v711 = vadd.f32 %v317, %v710
        %712 = vmatprep.mubr.bf16.mxu0 %v308
        %713 = vmatmul.mubr.bf16.gmra.mxu0 %v307
        %v714 = vpop.f32.mrf.mxu0
        %v715 = vadd.f32 %v313, %v714
        %v716 = vpop.f32.mrf.mxu0
        %v717 = vadd.f32 %v317, %v716
        %v718 = vpop.f32.mrf.mxu0
        %v719 = vadd.f32 %v313, %v718
        %v720 = vpop.f32.mrf.mxu0
        %v721 = vadd.f32 %v317, %v720
        %722 = vdwg.mxu0
        %723 = vmatprep.subr.bf16.mxu0 %v553
        %724 = vmatpush1.bf16.msra.mxu0 %v552
        %725 = vmatprep.subr.bf16.mxu0 %v549
        %726 = vmatpush1.bf16.msra.mxu0 %v548
        %727 = vmatprep.subr.bf16.mxu0 %v545
        %728 = vmatpush1.bf16.msra.mxu0 %v544
        %729 = vmatprep.subr.bf16.mxu0 %v541
        %730 = vmatpush1.bf16.msra.mxu0 %v540
        %731 = vmatprep.subr.bf16.mxu0 %v537
        %732 = vmatpush1.bf16.msra.mxu0 %v536
        %733 = vmatprep.subr.bf16.mxu0 %v533
        %734 = vmatpush1.bf16.msra.mxu0 %v532
        %735 = vmatprep.subr.bf16.mxu0 %v529
        %736 = vmatpush1.bf16.msra.mxu0 %v528
        %737 = vmatprep.subr.bf16.mxu0 %v525
        %738 = vmatpush1.bf16.msra.mxu0 %v524
        %739 = vmatprep.subr.bf16.mxu0 %v585
        %740 = vmatpush2.bf16.msra.mxu0 %v584
        %741 = vmatprep.subr.bf16.mxu0 %v581
        %742 = vmatpush2.bf16.msra.mxu0 %v580
        %743 = vmatprep.subr.bf16.mxu0 %v577
        %744 = vmatpush2.bf16.msra.mxu0 %v576
        %745 = vmatprep.subr.bf16.mxu0 %v573
        %746 = vmatpush2.bf16.msra.mxu0 %v572
        %747 = vmatprep.subr.bf16.mxu0 %v569
        %748 = vmatpush2.bf16.msra.mxu0 %v568
        %749 = vmatprep.subr.bf16.mxu0 %v565
        %750 = vmatpush2.bf16.msra.mxu0 %v564
        %751 = vmatprep.subr.bf16.mxu0 %v561
        %752 = vmatpush2.bf16.msra.mxu0 %v560
        %753 = vmatprep.subr.bf16.mxu0 %v557
        %754 = vmatpush2.bf16.msra.mxu0 %v556
        %755 = vmatprep.mubr.bf16.mxu0 %v302
        %756 = vmatmul.mubr.bf16.gmra.mxu0 %v301
        %v757 = vpop.f32.mrf.mxu0
        %v758 = vadd.f32 %v321, %v757
        %v759 = vpop.f32.mrf.mxu0
        %v760 = vadd.f32 %v325, %v759
        %v761 = vpop.f32.mrf.mxu0
        %v762 = vadd.f32 %v321, %v761
        %v763 = vpop.f32.mrf.mxu0
        %v764 = vadd.f32 %v325, %v763
        %765 = vmatprep.mubr.bf16.mxu0 %v304
        %766 = vmatmul.mubr.bf16.gmra.mxu0 %v303
        %v767 = vpop.f32.mrf.mxu0
        %v768 = vadd.f32 %v321, %v767
        %v769 = vpop.f32.mrf.mxu0
        %v770 = vadd.f32 %v325, %v769
        %v771 = vpop.f32.mrf.mxu0
        %v772 = vadd.f32 %v321, %v771
        %v773 = vpop.f32.mrf.mxu0
        %v774 = vadd.f32 %v325, %v773
        %775 = vmatprep.mubr.bf16.mxu0 %v306
        %776 = vmatmul.mubr.bf16.gmra.mxu0 %v305
        %v777 = vpop.f32.mrf.mxu0
        %v778 = vadd.f32 %v321, %v777
        %v779 = vpop.f32.mrf.mxu0
        %v780 = vadd.f32 %v325, %v779
        %v781 = vpop.f32.mrf.mxu0
        %v782 = vadd.f32 %v321, %v781
        %v783 = vpop.f32.mrf.mxu0
        %v784 = vadd.f32 %v325, %v783
        %785 = vmatprep.mubr.bf16.mxu0 %v308
        %786 = vmatmul.mubr.bf16.gmra.mxu0 %v307
        %v787 = vpop.f32.mrf.mxu0
        %v788 = vadd.f32 %v321, %v787
        %v789 = vpop.f32.mrf.mxu0
        %v790 = vadd.f32 %v325, %v789
        %v791 = vpop.f32.mrf.mxu0
        %v792 = vadd.f32 %v321, %v791
        %v793 = vpop.f32.mrf.mxu0
        %v794 = vadd.f32 %v325, %v793
        %795 = vdwg.mxu0
        %v796 = vmax.f32 %v685, 0.0
        %v797 = vmax.f32 %v687, 0.0
        %v798 = vmax.f32 %v758, 0.0
        %v799 = vmax.f32 %v760, 0.0
        %v800 = vmax.f32 %v689, 0.0
        %v801 = vmax.f32 %v691, 0.0
        %v802 = vmax.f32 %v762, 0.0
        %v803 = vmax.f32 %v764, 0.0
        %v804 = vmax.f32 %v695, 0.0
        %v805 = vmax.f32 %v697, 0.0
        %v806 = vmax.f32 %v768, 0.0
        %v807 = vmax.f32 %v770, 0.0
        %v808 = vmax.f32 %v699, 0.0
        %v809 = vmax.f32 %v701, 0.0
        %v810 = vmax.f32 %v772, 0.0
        %v811 = vmax.f32 %v774, 0.0
        %v812 = vmax.f32 %v705, 0.0
        %v813 = vmax.f32 %v707, 0.0
        %v814 = vmax.f32 %v778, 0.0
        %v815 = vmax.f32 %v780, 0.0
        %v816 = vmax.f32 %v709, 0.0
        %v817 = vmax.f32 %v711, 0.0
        %v818 = vmax.f32 %v782, 0.0
        %v819 = vmax.f32 %v784, 0.0
        %v820 = vmax.f32 %v715, 0.0
        %v821 = vmax.f32 %v717, 0.0
        %v822 = vmax.f32 %v788, 0.0
        %v823 = vmax.f32 %v790, 0.0
        %v824 = vmax.f32 %v719, 0.0
        %v825 = vmax.f32 %v721, 0.0
        %v826 = vmax.f32 %v792, 0.0
        %v827 = vmax.f32 %v794, 0.0
        %s828 = scalar_lea.vmem [#allocation5], 1024
        %v829 = vld [vmem:[%s828] sm:$0xff]
        %v830 = vld [vmem:[%s828 + $0x8] sm:$0xff]
        %v831 = vld [vmem:[%s828 + $0x10] sm:$0xff]
        %v832 = vld [vmem:[%s828 + $0x18] sm:$0xff]
        %v833 = vld [vmem:[%s828 + $0x20] sm:$0xff]
        %v834 = vld [vmem:[%s828 + $0x28] sm:$0xff]
        %v835 = vld [vmem:[%s828 + $0x30] sm:$0xff]
        %v836 = vld [vmem:[%s828 + $0x38] sm:$0xff]
        %v837 = vld [vmem:[%s828 + $0x40] sm:$0xff]
        %v838 = vld [vmem:[%s828 + $0x48] sm:$0xff]
        %v839 = vld [vmem:[%s828 + $0x50] sm:$0xff]
        %v840 = vld [vmem:[%s828 + $0x58] sm:$0xff]
        %v841 = vld [vmem:[%s828 + $0x60] sm:$0xff]
        %v842 = vld [vmem:[%s828 + $0x68] sm:$0xff]
        %v843 = vld [vmem:[%s828 + $0x70] sm:$0xff]
        %v844 = vld [vmem:[%s828 + $0x78] sm:$0xff]
        %v845 = vld [vmem:[%s828 + $0x80] sm:$0xff]
        %v846 = vld [vmem:[%s828 + $0x88] sm:$0xff]
        %v847 = vld [vmem:[%s828 + $0x90] sm:$0xff]
        %v848 = vld [vmem:[%s828 + $0x98] sm:$0xff]
        %v849 = vld [vmem:[%s828 + $0xa0] sm:$0xff]
        %v850 = vld [vmem:[%s828 + $0xa8] sm:$0xff]
        %v851 = vld [vmem:[%s828 + $0xb0] sm:$0xff]
        %v852 = vld [vmem:[%s828 + $0xb8] sm:$0xff]
        %v853 = vld [vmem:[%s828 + $0xc0] sm:$0xff]
        %v854 = vld [vmem:[%s828 + $0xc8] sm:$0xff]
        %v855 = vld [vmem:[%s828 + $0xd0] sm:$0xff]
        %v856 = vld [vmem:[%s828 + $0xd8] sm:$0xff]
        %v857 = vld [vmem:[%s828 + $0xe0] sm:$0xff]
        %v858 = vld [vmem:[%s828 + $0xe8] sm:$0xff]
        %v859 = vld [vmem:[%s828 + $0xf0] sm:$0xff]
        %v860 = vld [vmem:[%s828 + $0xf8] sm:$0xff]
        %v861 = vld [vmem:[%s828 + $0x100] sm:$0xff]
        %v862 = vld [vmem:[%s828 + $0x108] sm:$0xff]
        %v863 = vld [vmem:[%s828 + $0x110] sm:$0xff]
        %v864 = vld [vmem:[%s828 + $0x118] sm:$0xff]
        %v865 = vld [vmem:[%s828 + $0x120] sm:$0xff]
        %v866 = vld [vmem:[%s828 + $0x128] sm:$0xff]
        %v867 = vld [vmem:[%s828 + $0x130] sm:$0xff]
        %v868 = vld [vmem:[%s828 + $0x138] sm:$0xff]
        %v869 = vld [vmem:[%s828 + $0x140] sm:$0xff]
        %v870 = vld [vmem:[%s828 + $0x148] sm:$0xff]
        %v871 = vld [vmem:[%s828 + $0x150] sm:$0xff]
        %v872 = vld [vmem:[%s828 + $0x158] sm:$0xff]
        %v873 = vld [vmem:[%s828 + $0x160] sm:$0xff]
        %v874 = vld [vmem:[%s828 + $0x168] sm:$0xff]
        %v875 = vld [vmem:[%s828 + $0x170] sm:$0xff]
        %v876 = vld [vmem:[%s828 + $0x178] sm:$0xff]
        %v877 = vld [vmem:[%s828 + $0x180] sm:$0xff]
        %v878 = vld [vmem:[%s828 + $0x188] sm:$0xff]
        %v879 = vld [vmem:[%s828 + $0x190] sm:$0xff]
        %v880 = vld [vmem:[%s828 + $0x198] sm:$0xff]
        %v881 = vld [vmem:[%s828 + $0x1a0] sm:$0xff]
        %v882 = vld [vmem:[%s828 + $0x1a8] sm:$0xff]
        %v883 = vld [vmem:[%s828 + $0x1b0] sm:$0xff]
        %v884 = vld [vmem:[%s828 + $0x1b8] sm:$0xff]
        %v885 = vld [vmem:[%s828 + $0x1c0] sm:$0xff]
        %v886 = vld [vmem:[%s828 + $0x1c8] sm:$0xff]
        %v887 = vld [vmem:[%s828 + $0x1d0] sm:$0xff]
        %v888 = vld [vmem:[%s828 + $0x1d8] sm:$0xff]
        %v889 = vld [vmem:[%s828 + $0x1e0] sm:$0xff]
        %v890 = vld [vmem:[%s828 + $0x1e8] sm:$0xff]
        %v891 = vld [vmem:[%s828 + $0x1f0] sm:$0xff]
        %v892 = vld [vmem:[%s828 + $0x1f8] sm:$0xff]
        %v893 = vld [vmem:[%s828 + $0x200] sm:$0xff]
        %v894 = vld [vmem:[%s828 + $0x208] sm:$0xff]
        %v895 = vld [vmem:[%s828 + $0x210] sm:$0xff]
        %v896 = vld [vmem:[%s828 + $0x218] sm:$0xff]
        %v897 = vld [vmem:[%s828 + $0x220] sm:$0xff]
        %v898 = vld [vmem:[%s828 + $0x228] sm:$0xff]
        %v899 = vld [vmem:[%s828 + $0x230] sm:$0xff]
        %v900 = vld [vmem:[%s828 + $0x238] sm:$0xff]
        %v901 = vld [vmem:[%s828 + $0x240] sm:$0xff]
        %v902 = vld [vmem:[%s828 + $0x248] sm:$0xff]
        %v903 = vld [vmem:[%s828 + $0x250] sm:$0xff]
        %v904 = vld [vmem:[%s828 + $0x258] sm:$0xff]
        %v905 = vld [vmem:[%s828 + $0x260] sm:$0xff]
        %v906 = vld [vmem:[%s828 + $0x268] sm:$0xff]
        %v907 = vld [vmem:[%s828 + $0x270] sm:$0xff]
        %v908 = vld [vmem:[%s828 + $0x278] sm:$0xff]
        %v909 = vld [vmem:[%s828 + $0x280] sm:$0xff]
        %v910 = vld [vmem:[%s828 + $0x288] sm:$0xff]
        %v911 = vld [vmem:[%s828 + $0x290] sm:$0xff]
        %v912 = vld [vmem:[%s828 + $0x298] sm:$0xff]
        %v913 = vld [vmem:[%s828 + $0x2a0] sm:$0xff]
        %v914 = vld [vmem:[%s828 + $0x2a8] sm:$0xff]
        %v915 = vld [vmem:[%s828 + $0x2b0] sm:$0xff]
        %v916 = vld [vmem:[%s828 + $0x2b8] sm:$0xff]
        %v917 = vld [vmem:[%s828 + $0x2c0] sm:$0xff]
        %v918 = vld [vmem:[%s828 + $0x2c8] sm:$0xff]
        %v919 = vld [vmem:[%s828 + $0x2d0] sm:$0xff]
        %v920 = vld [vmem:[%s828 + $0x2d8] sm:$0xff]
        %v921 = vld [vmem:[%s828 + $0x2e0] sm:$0xff]
        %v922 = vld [vmem:[%s828 + $0x2e8] sm:$0xff]
        %v923 = vld [vmem:[%s828 + $0x2f0] sm:$0xff]
        %v924 = vld [vmem:[%s828 + $0x2f8] sm:$0xff]
        %v925 = vld [vmem:[%s828 + $0x300] sm:$0xff]
        %v926 = vld [vmem:[%s828 + $0x308] sm:$0xff]
        %v927 = vld [vmem:[%s828 + $0x310] sm:$0xff]
        %v928 = vld [vmem:[%s828 + $0x318] sm:$0xff]
        %v929 = vld [vmem:[%s828 + $0x320] sm:$0xff]
        %v930 = vld [vmem:[%s828 + $0x328] sm:$0xff]
        %v931 = vld [vmem:[%s828 + $0x330] sm:$0xff]
        %v932 = vld [vmem:[%s828 + $0x338] sm:$0xff]
        %v933 = vld [vmem:[%s828 + $0x340] sm:$0xff]
        %v934 = vld [vmem:[%s828 + $0x348] sm:$0xff]
        %v935 = vld [vmem:[%s828 + $0x350] sm:$0xff]
        %v936 = vld [vmem:[%s828 + $0x358] sm:$0xff]
        %v937 = vld [vmem:[%s828 + $0x360] sm:$0xff]
        %v938 = vld [vmem:[%s828 + $0x368] sm:$0xff]
        %v939 = vld [vmem:[%s828 + $0x370] sm:$0xff]
        %v940 = vld [vmem:[%s828 + $0x378] sm:$0xff]
        %v941 = vld [vmem:[%s828 + $0x380] sm:$0xff]
        %v942 = vld [vmem:[%s828 + $0x388] sm:$0xff]
        %v943 = vld [vmem:[%s828 + $0x390] sm:$0xff]
        %v944 = vld [vmem:[%s828 + $0x398] sm:$0xff]
        %v945 = vld [vmem:[%s828 + $0x3a0] sm:$0xff]
        %v946 = vld [vmem:[%s828 + $0x3a8] sm:$0xff]
        %v947 = vld [vmem:[%s828 + $0x3b0] sm:$0xff]
        %v948 = vld [vmem:[%s828 + $0x3b8] sm:$0xff]
        %v949 = vld [vmem:[%s828 + $0x3c0] sm:$0xff]
        %v950 = vld [vmem:[%s828 + $0x3c8] sm:$0xff]
        %v951 = vld [vmem:[%s828 + $0x3d0] sm:$0xff]
        %v952 = vld [vmem:[%s828 + $0x3d8] sm:$0xff]
        %v953 = vld [vmem:[%s828 + $0x3e0] sm:$0xff]
        %v954 = vld [vmem:[%s828 + $0x3e8] sm:$0xff]
        %v955 = vld [vmem:[%s828 + $0x3f0] sm:$0xff]
        %v956 = vld [vmem:[%s828 + $0x3f8] sm:$0xff]
        %s957 = scalar_lea.vmem [#allocation7], 1
        %v958 = vld [vmem:[%s957] ss:$4 sm:$0xf]
        %v959 = vpack.c.bf16 %v800, %v796
        %v960 = vpack.c.bf16 %v801, %v797
        %v961 = vpack.c.bf16 %v802, %v798
        %v962 = vpack.c.bf16 %v803, %v799
        %v963 = vpack.c.bf16 %v808, %v804
        %v964 = vpack.c.bf16 %v809, %v805
        %v965 = vpack.c.bf16 %v810, %v806
        %v966 = vpack.c.bf16 %v811, %v807
        %v967 = vpack.c.bf16 %v816, %v812
        %v968 = vpack.c.bf16 %v817, %v813
        %v969 = vpack.c.bf16 %v818, %v814
        %v970 = vpack.c.bf16 %v819, %v815
        %v971 = vpack.c.bf16 %v824, %v820
        %v972 = vpack.c.bf16 %v825, %v821
        %v973 = vpack.c.bf16 %v826, %v822
        %v974 = vpack.c.bf16 %v827, %v823
        %v976 = vlaneseq
        %v977 = vshrl.u32 %v976, 7
        %v978 = vsub.s32 0, %v977
        %v979 = vrot.slane %v958, %v978
        %v980 = vlaneseq
        %v981 = vshrl.u32 %v980, 7
        %v982 = vsub.s32 1, %v981
        %v983 = vrot.slane %v958, %v982
        %v984 = vlaneseq
        %v985 = vshrl.u32 %v984, 7
        %v986 = vsub.s32 2, %v985
        %v987 = vrot.slane %v958, %v986
        %v988 = vlaneseq
        %v989 = vshrl.u32 %v988, 7
        %v990 = vsub.s32 3, %v989
        %v991 = vrot.slane %v958, %v990
        %v1124 = vunpack.c.l.b16 %v829
        %v1125 = vunpack.c.h.b16 %v829
        %v1126 = vunpack.c.l.b16 %v830
        %v1127 = vunpack.c.h.b16 %v830
        %v1128 = vunpack.c.l.b16 %v831
        %v1129 = vunpack.c.h.b16 %v831
        %v1130 = vunpack.c.l.b16 %v832
        %v1131 = vunpack.c.h.b16 %v832
        %v1132 = vunpack.c.l.b16 %v833
        %v1133 = vunpack.c.h.b16 %v833
        %v1134 = vunpack.c.l.b16 %v834
        %v1135 = vunpack.c.h.b16 %v834
        %v1136 = vunpack.c.l.b16 %v835
        %v1137 = vunpack.c.h.b16 %v835
        %v1138 = vunpack.c.l.b16 %v836
        %v1139 = vunpack.c.h.b16 %v836
        %v1140 = vunpack.c.l.b16 %v837
        %v1141 = vunpack.c.h.b16 %v837
        %v1142 = vunpack.c.l.b16 %v838
        %v1143 = vunpack.c.h.b16 %v838
        %v1144 = vunpack.c.l.b16 %v839
        %v1145 = vunpack.c.h.b16 %v839
        %v1146 = vunpack.c.l.b16 %v840
        %v1147 = vunpack.c.h.b16 %v840
        %v1148 = vunpack.c.l.b16 %v841
        %v1149 = vunpack.c.h.b16 %v841
        %v1150 = vunpack.c.l.b16 %v842
        %v1151 = vunpack.c.h.b16 %v842
        %v1152 = vunpack.c.l.b16 %v843
        %v1153 = vunpack.c.h.b16 %v843
        %v1154 = vunpack.c.l.b16 %v844
        %v1155 = vunpack.c.h.b16 %v844
        %v1156 = vunpack.c.l.b16 %v845
        %v1157 = vunpack.c.h.b16 %v845
        %v1158 = vunpack.c.l.b16 %v846
        %v1159 = vunpack.c.h.b16 %v846
        %v1160 = vunpack.c.l.b16 %v847
        %v1161 = vunpack.c.h.b16 %v847
        %v1162 = vunpack.c.l.b16 %v848
        %v1163 = vunpack.c.h.b16 %v848
        %v1164 = vunpack.c.l.b16 %v849
        %v1165 = vunpack.c.h.b16 %v849
        %v1166 = vunpack.c.l.b16 %v850
        %v1167 = vunpack.c.h.b16 %v850
        %v1168 = vunpack.c.l.b16 %v851
        %v1169 = vunpack.c.h.b16 %v851
        %v1170 = vunpack.c.l.b16 %v852
        %v1171 = vunpack.c.h.b16 %v852
        %v1172 = vunpack.c.l.b16 %v853
        %v1173 = vunpack.c.h.b16 %v853
        %v1174 = vunpack.c.l.b16 %v854
        %v1175 = vunpack.c.h.b16 %v854
        %v1176 = vunpack.c.l.b16 %v855
        %v1177 = vunpack.c.h.b16 %v855
        %v1178 = vunpack.c.l.b16 %v856
        %v1179 = vunpack.c.h.b16 %v856
        %v1180 = vunpack.c.l.b16 %v857
        %v1181 = vunpack.c.h.b16 %v857
        %v1182 = vunpack.c.l.b16 %v858
        %v1183 = vunpack.c.h.b16 %v858
        %v1184 = vunpack.c.l.b16 %v859
        %v1185 = vunpack.c.h.b16 %v859
        %v1186 = vunpack.c.l.b16 %v860
        %v1187 = vunpack.c.h.b16 %v860
        %v1188 = vunpack.c.l.b16 %v861
        %v1189 = vunpack.c.h.b16 %v861
        %v1190 = vunpack.c.l.b16 %v862
        %v1191 = vunpack.c.h.b16 %v862
        %v1192 = vunpack.c.l.b16 %v863
        %v1193 = vunpack.c.h.b16 %v863
        %v1194 = vunpack.c.l.b16 %v864
        %v1195 = vunpack.c.h.b16 %v864
        %v1196 = vunpack.c.l.b16 %v865
        %v1197 = vunpack.c.h.b16 %v865
        %v1198 = vunpack.c.l.b16 %v866
        %v1199 = vunpack.c.h.b16 %v866
        %v1200 = vunpack.c.l.b16 %v867
        %v1201 = vunpack.c.h.b16 %v867
        %v1202 = vunpack.c.l.b16 %v868
        %v1203 = vunpack.c.h.b16 %v868
        %v1204 = vunpack.c.l.b16 %v869
        %v1205 = vunpack.c.h.b16 %v869
        %v1206 = vunpack.c.l.b16 %v870
        %v1207 = vunpack.c.h.b16 %v870
        %v1208 = vunpack.c.l.b16 %v871
        %v1209 = vunpack.c.h.b16 %v871
        %v1210 = vunpack.c.l.b16 %v872
        %v1211 = vunpack.c.h.b16 %v872
        %v1212 = vunpack.c.l.b16 %v873
        %v1213 = vunpack.c.h.b16 %v873
        %v1214 = vunpack.c.l.b16 %v874
        %v1215 = vunpack.c.h.b16 %v874
        %v1216 = vunpack.c.l.b16 %v875
        %v1217 = vunpack.c.h.b16 %v875
        %v1218 = vunpack.c.l.b16 %v876
        %v1219 = vunpack.c.h.b16 %v876
        %v1220 = vunpack.c.l.b16 %v877
        %v1221 = vunpack.c.h.b16 %v877
        %v1222 = vunpack.c.l.b16 %v878
        %v1223 = vunpack.c.h.b16 %v878
        %v1224 = vunpack.c.l.b16 %v879
        %v1225 = vunpack.c.h.b16 %v879
        %v1226 = vunpack.c.l.b16 %v880
        %v1227 = vunpack.c.h.b16 %v880
        %v1228 = vunpack.c.l.b16 %v881
        %v1229 = vunpack.c.h.b16 %v881
        %v1230 = vunpack.c.l.b16 %v882
        %v1231 = vunpack.c.h.b16 %v882
        %v1232 = vunpack.c.l.b16 %v883
        %v1233 = vunpack.c.h.b16 %v883
        %v1234 = vunpack.c.l.b16 %v884
        %v1235 = vunpack.c.h.b16 %v884
        %v1236 = vunpack.c.l.b16 %v885
        %v1237 = vunpack.c.h.b16 %v885
        %v1238 = vunpack.c.l.b16 %v886
        %v1239 = vunpack.c.h.b16 %v886
        %v1240 = vunpack.c.l.b16 %v887
        %v1241 = vunpack.c.h.b16 %v887
        %v1242 = vunpack.c.l.b16 %v888
        %v1243 = vunpack.c.h.b16 %v888
        %v1244 = vunpack.c.l.b16 %v889
        %v1245 = vunpack.c.h.b16 %v889
        %v1246 = vunpack.c.l.b16 %v890
        %v1247 = vunpack.c.h.b16 %v890
        %v1248 = vunpack.c.l.b16 %v891
        %v1249 = vunpack.c.h.b16 %v891
        %v1250 = vunpack.c.l.b16 %v892
        %v1251 = vunpack.c.h.b16 %v892
        %v1252 = vunpack.c.l.b16 %v893
        %v1253 = vunpack.c.h.b16 %v893
        %v1254 = vunpack.c.l.b16 %v894
        %v1255 = vunpack.c.h.b16 %v894
        %v1256 = vunpack.c.l.b16 %v895
        %v1257 = vunpack.c.h.b16 %v895
        %v1258 = vunpack.c.l.b16 %v896
        %v1259 = vunpack.c.h.b16 %v896
        %v1260 = vunpack.c.l.b16 %v897
        %v1261 = vunpack.c.h.b16 %v897
        %v1262 = vunpack.c.l.b16 %v898
        %v1263 = vunpack.c.h.b16 %v898
        %v1264 = vunpack.c.l.b16 %v899
        %v1265 = vunpack.c.h.b16 %v899
        %v1266 = vunpack.c.l.b16 %v900
        %v1267 = vunpack.c.h.b16 %v900
        %v1268 = vunpack.c.l.b16 %v901
        %v1269 = vunpack.c.h.b16 %v901
        %v1270 = vunpack.c.l.b16 %v902
        %v1271 = vunpack.c.h.b16 %v902
        %v1272 = vunpack.c.l.b16 %v903
        %v1273 = vunpack.c.h.b16 %v903
        %v1274 = vunpack.c.l.b16 %v904
        %v1275 = vunpack.c.h.b16 %v904
        %v1276 = vunpack.c.l.b16 %v905
        %v1277 = vunpack.c.h.b16 %v905
        %v1278 = vunpack.c.l.b16 %v906
        %v1279 = vunpack.c.h.b16 %v906
        %v1280 = vunpack.c.l.b16 %v907
        %v1281 = vunpack.c.h.b16 %v907
        %v1282 = vunpack.c.l.b16 %v908
        %v1283 = vunpack.c.h.b16 %v908
        %v1284 = vunpack.c.l.b16 %v909
        %v1285 = vunpack.c.h.b16 %v909
        %v1286 = vunpack.c.l.b16 %v910
        %v1287 = vunpack.c.h.b16 %v910
        %v1288 = vunpack.c.l.b16 %v911
        %v1289 = vunpack.c.h.b16 %v911
        %v1290 = vunpack.c.l.b16 %v912
        %v1291 = vunpack.c.h.b16 %v912
        %v1292 = vunpack.c.l.b16 %v913
        %v1293 = vunpack.c.h.b16 %v913
        %v1294 = vunpack.c.l.b16 %v914
        %v1295 = vunpack.c.h.b16 %v914
        %v1296 = vunpack.c.l.b16 %v915
        %v1297 = vunpack.c.h.b16 %v915
        %v1298 = vunpack.c.l.b16 %v916
        %v1299 = vunpack.c.h.b16 %v916
        %v1300 = vunpack.c.l.b16 %v917
        %v1301 = vunpack.c.h.b16 %v917
        %v1302 = vunpack.c.l.b16 %v918
        %v1303 = vunpack.c.h.b16 %v918
        %v1304 = vunpack.c.l.b16 %v919
        %v1305 = vunpack.c.h.b16 %v919
        %v1306 = vunpack.c.l.b16 %v920
        %v1307 = vunpack.c.h.b16 %v920
        %v1308 = vunpack.c.l.b16 %v921
        %v1309 = vunpack.c.h.b16 %v921
        %v1310 = vunpack.c.l.b16 %v922
        %v1311 = vunpack.c.h.b16 %v922
        %v1312 = vunpack.c.l.b16 %v923
        %v1313 = vunpack.c.h.b16 %v923
        %v1314 = vunpack.c.l.b16 %v924
        %v1315 = vunpack.c.h.b16 %v924
        %v1316 = vunpack.c.l.b16 %v925
        %v1317 = vunpack.c.h.b16 %v925
        %v1318 = vunpack.c.l.b16 %v926
        %v1319 = vunpack.c.h.b16 %v926
        %v1320 = vunpack.c.l.b16 %v927
        %v1321 = vunpack.c.h.b16 %v927
        %v1322 = vunpack.c.l.b16 %v928
        %v1323 = vunpack.c.h.b16 %v928
        %v1324 = vunpack.c.l.b16 %v929
        %v1325 = vunpack.c.h.b16 %v929
        %v1326 = vunpack.c.l.b16 %v930
        %v1327 = vunpack.c.h.b16 %v930
        %v1328 = vunpack.c.l.b16 %v931
        %v1329 = vunpack.c.h.b16 %v931
        %v1330 = vunpack.c.l.b16 %v932
        %v1331 = vunpack.c.h.b16 %v932
        %v1332 = vunpack.c.l.b16 %v933
        %v1333 = vunpack.c.h.b16 %v933
        %v1334 = vunpack.c.l.b16 %v934
        %v1335 = vunpack.c.h.b16 %v934
        %v1336 = vunpack.c.l.b16 %v935
        %v1337 = vunpack.c.h.b16 %v935
        %v1338 = vunpack.c.l.b16 %v936
        %v1339 = vunpack.c.h.b16 %v936
        %v1340 = vunpack.c.l.b16 %v937
        %v1341 = vunpack.c.h.b16 %v937
        %v1342 = vunpack.c.l.b16 %v938
        %v1343 = vunpack.c.h.b16 %v938
        %v1344 = vunpack.c.l.b16 %v939
        %v1345 = vunpack.c.h.b16 %v939
        %v1346 = vunpack.c.l.b16 %v940
        %v1347 = vunpack.c.h.b16 %v940
        %v1348 = vunpack.c.l.b16 %v941
        %v1349 = vunpack.c.h.b16 %v941
        %v1350 = vunpack.c.l.b16 %v942
        %v1351 = vunpack.c.h.b16 %v942
        %v1352 = vunpack.c.l.b16 %v943
        %v1353 = vunpack.c.h.b16 %v943
        %v1354 = vunpack.c.l.b16 %v944
        %v1355 = vunpack.c.h.b16 %v944
        %v1356 = vunpack.c.l.b16 %v945
        %v1357 = vunpack.c.h.b16 %v945
        %v1358 = vunpack.c.l.b16 %v946
        %v1359 = vunpack.c.h.b16 %v946
        %v1360 = vunpack.c.l.b16 %v947
        %v1361 = vunpack.c.h.b16 %v947
        %v1362 = vunpack.c.l.b16 %v948
        %v1363 = vunpack.c.h.b16 %v948
        %v1364 = vunpack.c.l.b16 %v949
        %v1365 = vunpack.c.h.b16 %v949
        %v1366 = vunpack.c.l.b16 %v950
        %v1367 = vunpack.c.h.b16 %v950
        %v1368 = vunpack.c.l.b16 %v951
        %v1369 = vunpack.c.h.b16 %v951
        %v1370 = vunpack.c.l.b16 %v952
        %v1371 = vunpack.c.h.b16 %v952
        %v1372 = vunpack.c.l.b16 %v953
        %v1373 = vunpack.c.h.b16 %v953
        %v1374 = vunpack.c.l.b16 %v954
        %v1375 = vunpack.c.h.b16 %v954
        %v1376 = vunpack.c.l.b16 %v955
        %v1377 = vunpack.c.h.b16 %v955
        %v1378 = vunpack.c.l.b16 %v956
        %v1379 = vunpack.c.h.b16 %v956
        %v1380 = vpack.c.b16 %v1128, %v1124
        %v1381 = vpack.c.b16 %v1129, %v1125
        %v1382 = vpack.c.b16 %v1130, %v1126
        %v1383 = vpack.c.b16 %v1131, %v1127
        %v1384 = vpack.c.b16 %v1136, %v1132
        %v1385 = vpack.c.b16 %v1137, %v1133
        %v1386 = vpack.c.b16 %v1138, %v1134
        %v1387 = vpack.c.b16 %v1139, %v1135
        %v1388 = vpack.c.b16 %v1144, %v1140
        %v1389 = vpack.c.b16 %v1145, %v1141
        %v1390 = vpack.c.b16 %v1146, %v1142
        %v1391 = vpack.c.b16 %v1147, %v1143
        %v1392 = vpack.c.b16 %v1152, %v1148
        %v1393 = vpack.c.b16 %v1153, %v1149
        %v1394 = vpack.c.b16 %v1154, %v1150
        %v1395 = vpack.c.b16 %v1155, %v1151
        %v1396 = vpack.c.b16 %v1160, %v1156
        %v1397 = vpack.c.b16 %v1161, %v1157
        %v1398 = vpack.c.b16 %v1162, %v1158
        %v1399 = vpack.c.b16 %v1163, %v1159
        %v1400 = vpack.c.b16 %v1168, %v1164
        %v1401 = vpack.c.b16 %v1169, %v1165
        %v1402 = vpack.c.b16 %v1170, %v1166
        %v1403 = vpack.c.b16 %v1171, %v1167
        %v1404 = vpack.c.b16 %v1176, %v1172
        %v1405 = vpack.c.b16 %v1177, %v1173
        %v1406 = vpack.c.b16 %v1178, %v1174
        %v1407 = vpack.c.b16 %v1179, %v1175
        %v1408 = vpack.c.b16 %v1184, %v1180
        %v1409 = vpack.c.b16 %v1185, %v1181
        %v1410 = vpack.c.b16 %v1186, %v1182
        %v1411 = vpack.c.b16 %v1187, %v1183
        %v1412 = vpack.c.b16 %v1192, %v1188
        %v1413 = vpack.c.b16 %v1193, %v1189
        %v1414 = vpack.c.b16 %v1194, %v1190
        %v1415 = vpack.c.b16 %v1195, %v1191
        %v1416 = vpack.c.b16 %v1200, %v1196
        %v1417 = vpack.c.b16 %v1201, %v1197
        %v1418 = vpack.c.b16 %v1202, %v1198
        %v1419 = vpack.c.b16 %v1203, %v1199
        %v1420 = vpack.c.b16 %v1208, %v1204
        %v1421 = vpack.c.b16 %v1209, %v1205
        %v1422 = vpack.c.b16 %v1210, %v1206
        %v1423 = vpack.c.b16 %v1211, %v1207
        %v1424 = vpack.c.b16 %v1216, %v1212
        %v1425 = vpack.c.b16 %v1217, %v1213
        %v1426 = vpack.c.b16 %v1218, %v1214
        %v1427 = vpack.c.b16 %v1219, %v1215
        %v1428 = vpack.c.b16 %v1224, %v1220
        %v1429 = vpack.c.b16 %v1225, %v1221
        %v1430 = vpack.c.b16 %v1226, %v1222
        %v1431 = vpack.c.b16 %v1227, %v1223
        %v1432 = vpack.c.b16 %v1232, %v1228
        %v1433 = vpack.c.b16 %v1233, %v1229
        %v1434 = vpack.c.b16 %v1234, %v1230
        %v1435 = vpack.c.b16 %v1235, %v1231
        %v1436 = vpack.c.b16 %v1240, %v1236
        %v1437 = vpack.c.b16 %v1241, %v1237
        %v1438 = vpack.c.b16 %v1242, %v1238
        %v1439 = vpack.c.b16 %v1243, %v1239
        %v1440 = vpack.c.b16 %v1248, %v1244
        %v1441 = vpack.c.b16 %v1249, %v1245
        %v1442 = vpack.c.b16 %v1250, %v1246
        %v1443 = vpack.c.b16 %v1251, %v1247
        %v1444 = vpack.c.b16 %v1256, %v1252
        %v1445 = vpack.c.b16 %v1257, %v1253
        %v1446 = vpack.c.b16 %v1258, %v1254
        %v1447 = vpack.c.b16 %v1259, %v1255
        %v1448 = vpack.c.b16 %v1264, %v1260
        %v1449 = vpack.c.b16 %v1265, %v1261
        %v1450 = vpack.c.b16 %v1266, %v1262
        %v1451 = vpack.c.b16 %v1267, %v1263
        %v1452 = vpack.c.b16 %v1272, %v1268
        %v1453 = vpack.c.b16 %v1273, %v1269
        %v1454 = vpack.c.b16 %v1274, %v1270
        %v1455 = vpack.c.b16 %v1275, %v1271
        %v1456 = vpack.c.b16 %v1280, %v1276
        %v1457 = vpack.c.b16 %v1281, %v1277
        %v1458 = vpack.c.b16 %v1282, %v1278
        %v1459 = vpack.c.b16 %v1283, %v1279
        %v1460 = vpack.c.b16 %v1288, %v1284
        %v1461 = vpack.c.b16 %v1289, %v1285
        %v1462 = vpack.c.b16 %v1290, %v1286
        %v1463 = vpack.c.b16 %v1291, %v1287
        %v1464 = vpack.c.b16 %v1296, %v1292
        %v1465 = vpack.c.b16 %v1297, %v1293
        %v1466 = vpack.c.b16 %v1298, %v1294
        %v1467 = vpack.c.b16 %v1299, %v1295
        %v1468 = vpack.c.b16 %v1304, %v1300
        %v1469 = vpack.c.b16 %v1305, %v1301
        %v1470 = vpack.c.b16 %v1306, %v1302
        %v1471 = vpack.c.b16 %v1307, %v1303
        %v1472 = vpack.c.b16 %v1312, %v1308
        %v1473 = vpack.c.b16 %v1313, %v1309
        %v1474 = vpack.c.b16 %v1314, %v1310
        %v1475 = vpack.c.b16 %v1315, %v1311
        %v1476 = vpack.c.b16 %v1320, %v1316
        %v1477 = vpack.c.b16 %v1321, %v1317
        %v1478 = vpack.c.b16 %v1322, %v1318
        %v1479 = vpack.c.b16 %v1323, %v1319
        %v1480 = vpack.c.b16 %v1328, %v1324
        %v1481 = vpack.c.b16 %v1329, %v1325
        %v1482 = vpack.c.b16 %v1330, %v1326
        %v1483 = vpack.c.b16 %v1331, %v1327
        %v1484 = vpack.c.b16 %v1336, %v1332
        %v1485 = vpack.c.b16 %v1337, %v1333
        %v1486 = vpack.c.b16 %v1338, %v1334
        %v1487 = vpack.c.b16 %v1339, %v1335
        %v1488 = vpack.c.b16 %v1344, %v1340
        %v1489 = vpack.c.b16 %v1345, %v1341
        %v1490 = vpack.c.b16 %v1346, %v1342
        %v1491 = vpack.c.b16 %v1347, %v1343
        %v1492 = vpack.c.b16 %v1352, %v1348
        %v1493 = vpack.c.b16 %v1353, %v1349
        %v1494 = vpack.c.b16 %v1354, %v1350
        %v1495 = vpack.c.b16 %v1355, %v1351
        %v1496 = vpack.c.b16 %v1360, %v1356
        %v1497 = vpack.c.b16 %v1361, %v1357
        %v1498 = vpack.c.b16 %v1362, %v1358
        %v1499 = vpack.c.b16 %v1363, %v1359
        %v1500 = vpack.c.b16 %v1368, %v1364
        %v1501 = vpack.c.b16 %v1369, %v1365
        %v1502 = vpack.c.b16 %v1370, %v1366
        %v1503 = vpack.c.b16 %v1371, %v1367
        %v1504 = vpack.c.b16 %v1376, %v1372
        %v1505 = vpack.c.b16 %v1377, %v1373
        %v1506 = vpack.c.b16 %v1378, %v1374
        %v1507 = vpack.c.b16 %v1379, %v1375
        %1636 = vmatprep.subr.bf16.mxu0 %v1409
        %1637 = vmatpush1.bf16.msra.mxu0 %v1408
        %1638 = vmatprep.subr.bf16.mxu0 %v1405
        %1639 = vmatpush1.bf16.msra.mxu0 %v1404
        %1640 = vmatprep.subr.bf16.mxu0 %v1401
        %1641 = vmatpush1.bf16.msra.mxu0 %v1400
        %1642 = vmatprep.subr.bf16.mxu0 %v1397
        %1643 = vmatpush1.bf16.msra.mxu0 %v1396
        %1644 = vmatprep.subr.bf16.mxu0 %v1393
        %1645 = vmatpush1.bf16.msra.mxu0 %v1392
        %1646 = vmatprep.subr.bf16.mxu0 %v1389
        %1647 = vmatpush1.bf16.msra.mxu0 %v1388
        %1648 = vmatprep.subr.bf16.mxu0 %v1385
        %1649 = vmatpush1.bf16.msra.mxu0 %v1384
        %1650 = vmatprep.subr.bf16.mxu0 %v1381
        %1651 = vmatpush1.bf16.msra.mxu0 %v1380
        %1652 = vmatprep.subr.bf16.mxu0 %v1441
        %1653 = vmatpush2.bf16.msra.mxu0 %v1440
        %1654 = vmatprep.subr.bf16.mxu0 %v1437
        %1655 = vmatpush2.bf16.msra.mxu0 %v1436
        %1656 = vmatprep.subr.bf16.mxu0 %v1433
        %1657 = vmatpush2.bf16.msra.mxu0 %v1432
        %1658 = vmatprep.subr.bf16.mxu0 %v1429
        %1659 = vmatpush2.bf16.msra.mxu0 %v1428
        %1660 = vmatprep.subr.bf16.mxu0 %v1425
        %1661 = vmatpush2.bf16.msra.mxu0 %v1424
        %1662 = vmatprep.subr.bf16.mxu0 %v1421
        %1663 = vmatpush2.bf16.msra.mxu0 %v1420
        %1664 = vmatprep.subr.bf16.mxu0 %v1417
        %1665 = vmatpush2.bf16.msra.mxu0 %v1416
        %1666 = vmatprep.subr.bf16.mxu0 %v1413
        %1667 = vmatpush2.bf16.msra.mxu0 %v1412
        %1668 = vmatprep.mubr.bf16.mxu0 %v960
        %1669 = vmatmul.mubr.bf16.gmra.mxu0 %v959
        %v1670 = vpop.f32.mrf.mxu0
        %v1671 = vadd.f32 %v979, %v1670
        %v1672 = vpop.f32.mrf.mxu0
        %v1673 = vadd.f32 %v983, %v1672
        %v1674 = vpop.f32.mrf.mxu0
        %v1675 = vadd.f32 %v979, %v1674
        %v1676 = vpop.f32.mrf.mxu0
        %v1677 = vadd.f32 %v983, %v1676
        %1678 = vmatprep.mubr.bf16.mxu0 %v964
        %1679 = vmatmul.mubr.bf16.gmra.mxu0 %v963
        %v1680 = vpop.f32.mrf.mxu0
        %v1681 = vadd.f32 %v979, %v1680
        %v1682 = vpop.f32.mrf.mxu0
        %v1683 = vadd.f32 %v983, %v1682
        %v1684 = vpop.f32.mrf.mxu0
        %v1685 = vadd.f32 %v979, %v1684
        %v1686 = vpop.f32.mrf.mxu0
        %v1687 = vadd.f32 %v983, %v1686
        %1688 = vmatprep.mubr.bf16.mxu0 %v968
        %1689 = vmatmul.mubr.bf16.gmra.mxu0 %v967
        %v1690 = vpop.f32.mrf.mxu0
        %v1691 = vadd.f32 %v979, %v1690
        %v1692 = vpop.f32.mrf.mxu0
        %v1693 = vadd.f32 %v983, %v1692
        %v1694 = vpop.f32.mrf.mxu0
        %v1695 = vadd.f32 %v979, %v1694
        %v1696 = vpop.f32.mrf.mxu0
        %v1697 = vadd.f32 %v983, %v1696
        %1698 = vmatprep.mubr.bf16.mxu0 %v972
        %1699 = vmatmul.mubr.bf16.gmra.mxu0 %v971
        %v1700 = vpop.f32.mrf.mxu0
        %v1701 = vadd.f32 %v979, %v1700
        %v1702 = vpop.f32.mrf.mxu0
        %v1703 = vadd.f32 %v983, %v1702
        %v1704 = vpop.f32.mrf.mxu0
        %v1705 = vadd.f32 %v979, %v1704
        %v1706 = vpop.f32.mrf.mxu0
        %v1707 = vadd.f32 %v983, %v1706
        %1708 = vdwg.mxu0
        %1709 = vmatprep.subr.bf16.mxu0 %v1473
        %1710 = vmatpush1.bf16.msra.mxu0 %v1472
        %1711 = vmatprep.subr.bf16.mxu0 %v1469
        %1712 = vmatpush1.bf16.msra.mxu0 %v1468
        %1713 = vmatprep.subr.bf16.mxu0 %v1465
        %1714 = vmatpush1.bf16.msra.mxu0 %v1464
        %1715 = vmatprep.subr.bf16.mxu0 %v1461
        %1716 = vmatpush1.bf16.msra.mxu0 %v1460
        %1717 = vmatprep.subr.bf16.mxu0 %v1457
        %1718 = vmatpush1.bf16.msra.mxu0 %v1456
        %1719 = vmatprep.subr.bf16.mxu0 %v1453
        %1720 = vmatpush1.bf16.msra.mxu0 %v1452
        %1721 = vmatprep.subr.bf16.mxu0 %v1449
        %1722 = vmatpush1.bf16.msra.mxu0 %v1448
        %1723 = vmatprep.subr.bf16.mxu0 %v1445
        %1724 = vmatpush1.bf16.msra.mxu0 %v1444
        %1725 = vmatprep.subr.bf16.mxu0 %v1505
        %1726 = vmatpush2.bf16.msra.mxu0 %v1504
        %1727 = vmatprep.subr.bf16.mxu0 %v1501
        %1728 = vmatpush2.bf16.msra.mxu0 %v1500
        %1729 = vmatprep.subr.bf16.mxu0 %v1497
        %1730 = vmatpush2.bf16.msra.mxu0 %v1496
        %1731 = vmatprep.subr.bf16.mxu0 %v1493
        %1732 = vmatpush2.bf16.msra.mxu0 %v1492
        %1733 = vmatprep.subr.bf16.mxu0 %v1489
        %1734 = vmatpush2.bf16.msra.mxu0 %v1488
        %1735 = vmatprep.subr.bf16.mxu0 %v1485
        %1736 = vmatpush2.bf16.msra.mxu0 %v1484
        %1737 = vmatprep.subr.bf16.mxu0 %v1481
        %1738 = vmatpush2.bf16.msra.mxu0 %v1480
        %1739 = vmatprep.subr.bf16.mxu0 %v1477
        %1740 = vmatpush2.bf16.msra.mxu0 %v1476
        %1741 = vmatprep.mubr.bf16.mxu0 %v962
        %1742 = vmatmul.mubr.bf16.gmra.mxu0 %v961
        %v1743 = vpop.f32.mrf.mxu0
        %v1744 = vadd.f32 %v1671, %v1743
        %v1745 = vpop.f32.mrf.mxu0
        %v1746 = vadd.f32 %v1673, %v1745
        %v1747 = vpop.f32.mrf.mxu0
        %v1748 = vadd.f32 %v1675, %v1747
        %v1749 = vpop.f32.mrf.mxu0
        %v1750 = vadd.f32 %v1677, %v1749
        %1751 = vmatprep.mubr.bf16.mxu0 %v966
        %1752 = vmatmul.mubr.bf16.gmra.mxu0 %v965
        %v1753 = vpop.f32.mrf.mxu0
        %v1754 = vadd.f32 %v1681, %v1753
        %v1755 = vpop.f32.mrf.mxu0
        %v1756 = vadd.f32 %v1683, %v1755
        %v1757 = vpop.f32.mrf.mxu0
        %v1758 = vadd.f32 %v1685, %v1757
        %v1759 = vpop.f32.mrf.mxu0
        %v1760 = vadd.f32 %v1687, %v1759
        %1761 = vmatprep.mubr.bf16.mxu0 %v970
        %1762 = vmatmul.mubr.bf16.gmra.mxu0 %v969
        %v1763 = vpop.f32.mrf.mxu0
        %v1764 = vadd.f32 %v1691, %v1763
        %v1765 = vpop.f32.mrf.mxu0
        %v1766 = vadd.f32 %v1693, %v1765
        %v1767 = vpop.f32.mrf.mxu0
        %v1768 = vadd.f32 %v1695, %v1767
        %v1769 = vpop.f32.mrf.mxu0
        %v1770 = vadd.f32 %v1697, %v1769
        %1771 = vmatprep.mubr.bf16.mxu0 %v974
        %1772 = vmatmul.mubr.bf16.gmra.mxu0 %v973
        %v1773 = vpop.f32.mrf.mxu0
        %v1774 = vadd.f32 %v1701, %v1773
        %v1775 = vpop.f32.mrf.mxu0
        %v1776 = vadd.f32 %v1703, %v1775
        %v1777 = vpop.f32.mrf.mxu0
        %v1778 = vadd.f32 %v1705, %v1777
        %v1779 = vpop.f32.mrf.mxu0
        %v1780 = vadd.f32 %v1707, %v1779
        %1781 = vdwg.mxu0
        %1782 = vmatprep.subr.bf16.mxu0 %v1411
        %1783 = vmatpush1.bf16.msra.mxu0 %v1410
        %1784 = vmatprep.subr.bf16.mxu0 %v1407
        %1785 = vmatpush1.bf16.msra.mxu0 %v1406
        %1786 = vmatprep.subr.bf16.mxu0 %v1403
        %1787 = vmatpush1.bf16.msra.mxu0 %v1402
        %1788 = vmatprep.subr.bf16.mxu0 %v1399
        %1789 = vmatpush1.bf16.msra.mxu0 %v1398
        %1790 = vmatprep.subr.bf16.mxu0 %v1395
        %1791 = vmatpush1.bf16.msra.mxu0 %v1394
        %1792 = vmatprep.subr.bf16.mxu0 %v1391
        %1793 = vmatpush1.bf16.msra.mxu0 %v1390
        %1794 = vmatprep.subr.bf16.mxu0 %v1387
        %1795 = vmatpush1.bf16.msra.mxu0 %v1386
        %1796 = vmatprep.subr.bf16.mxu0 %v1383
        %1797 = vmatpush1.bf16.msra.mxu0 %v1382
        %1798 = vmatprep.subr.bf16.mxu0 %v1443
        %1799 = vmatpush2.bf16.msra.mxu0 %v1442
        %1800 = vmatprep.subr.bf16.mxu0 %v1439
        %1801 = vmatpush2.bf16.msra.mxu0 %v1438
        %1802 = vmatprep.subr.bf16.mxu0 %v1435
        %1803 = vmatpush2.bf16.msra.mxu0 %v1434
        %1804 = vmatprep.subr.bf16.mxu0 %v1431
        %1805 = vmatpush2.bf16.msra.mxu0 %v1430
        %1806 = vmatprep.subr.bf16.mxu0 %v1427
        %1807 = vmatpush2.bf16.msra.mxu0 %v1426
        %1808 = vmatprep.subr.bf16.mxu0 %v1423
        %1809 = vmatpush2.bf16.msra.mxu0 %v1422
        %1810 = vmatprep.subr.bf16.mxu0 %v1419
        %1811 = vmatpush2.bf16.msra.mxu0 %v1418
        %1812 = vmatprep.subr.bf16.mxu0 %v1415
        %1813 = vmatpush2.bf16.msra.mxu0 %v1414
        %1814 = vmatprep.mubr.bf16.mxu0 %v960
        %1815 = vmatmul.mubr.bf16.gmra.mxu0 %v959
        %v1816 = vpop.f32.mrf.mxu0
        %v1817 = vadd.f32 %v987, %v1816
        %v1818 = vpop.f32.mrf.mxu0
        %v1819 = vadd.f32 %v991, %v1818
        %v1820 = vpop.f32.mrf.mxu0
        %v1821 = vadd.f32 %v987, %v1820
        %v1822 = vpop.f32.mrf.mxu0
        %v1823 = vadd.f32 %v991, %v1822
        %1824 = vmatprep.mubr.bf16.mxu0 %v964
        %1825 = vmatmul.mubr.bf16.gmra.mxu0 %v963
        %v1826 = vpop.f32.mrf.mxu0
        %v1827 = vadd.f32 %v987, %v1826
        %v1828 = vpop.f32.mrf.mxu0
        %v1829 = vadd.f32 %v991, %v1828
        %v1830 = vpop.f32.mrf.mxu0
        %v1831 = vadd.f32 %v987, %v1830
        %v1832 = vpop.f32.mrf.mxu0
        %v1833 = vadd.f32 %v991, %v1832
        %1834 = vmatprep.mubr.bf16.mxu0 %v968
        %1835 = vmatmul.mubr.bf16.gmra.mxu0 %v967
        %v1836 = vpop.f32.mrf.mxu0
        %v1837 = vadd.f32 %v987, %v1836
        %v1838 = vpop.f32.mrf.mxu0
        %v1839 = vadd.f32 %v991, %v1838
        %v1840 = vpop.f32.mrf.mxu0
        %v1841 = vadd.f32 %v987, %v1840
        %v1842 = vpop.f32.mrf.mxu0
        %v1843 = vadd.f32 %v991, %v1842
        %1844 = vmatprep.mubr.bf16.mxu0 %v972
        %1845 = vmatmul.mubr.bf16.gmra.mxu0 %v971
        %v1846 = vpop.f32.mrf.mxu0
        %v1847 = vadd.f32 %v987, %v1846
        %v1848 = vpop.f32.mrf.mxu0
        %v1849 = vadd.f32 %v991, %v1848
        %v1850 = vpop.f32.mrf.mxu0
        %v1851 = vadd.f32 %v987, %v1850
        %v1852 = vpop.f32.mrf.mxu0
        %v1853 = vadd.f32 %v991, %v1852
        %1854 = vdwg.mxu0
        %1855 = vmatprep.subr.bf16.mxu0 %v1475
        %1856 = vmatpush1.bf16.msra.mxu0 %v1474
        %1857 = vmatprep.subr.bf16.mxu0 %v1471
        %1858 = vmatpush1.bf16.msra.mxu0 %v1470
        %1859 = vmatprep.subr.bf16.mxu0 %v1467
        %1860 = vmatpush1.bf16.msra.mxu0 %v1466
        %1861 = vmatprep.subr.bf16.mxu0 %v1463
        %1862 = vmatpush1.bf16.msra.mxu0 %v1462
        %1863 = vmatprep.subr.bf16.mxu0 %v1459
        %1864 = vmatpush1.bf16.msra.mxu0 %v1458
        %1865 = vmatprep.subr.bf16.mxu0 %v1455
        %1866 = vmatpush1.bf16.msra.mxu0 %v1454
        %1867 = vmatprep.subr.bf16.mxu0 %v1451
        %1868 = vmatpush1.bf16.msra.mxu0 %v1450
        %1869 = vmatprep.subr.bf16.mxu0 %v1447
        %1870 = vmatpush1.bf16.msra.mxu0 %v1446
        %1871 = vmatprep.subr.bf16.mxu0 %v1507
        %1872 = vmatpush2.bf16.msra.mxu0 %v1506
        %1873 = vmatprep.subr.bf16.mxu0 %v1503
        %1874 = vmatpush2.bf16.msra.mxu0 %v1502
        %1875 = vmatprep.subr.bf16.mxu0 %v1499
        %1876 = vmatpush2.bf16.msra.mxu0 %v1498
        %1877 = vmatprep.subr.bf16.mxu0 %v1495
        %1878 = vmatpush2.bf16.msra.mxu0 %v1494
        %1879 = vmatprep.subr.bf16.mxu0 %v1491
        %1880 = vmatpush2.bf16.msra.mxu0 %v1490
        %1881 = vmatprep.subr.bf16.mxu0 %v1487
        %1882 = vmatpush2.bf16.msra.mxu0 %v1486
        %1883 = vmatprep.subr.bf16.mxu0 %v1483
        %1884 = vmatpush2.bf16.msra.mxu0 %v1482
        %1885 = vmatprep.subr.bf16.mxu0 %v1479
        %1886 = vmatpush2.bf16.msra.mxu0 %v1478
        %1887 = vmatprep.mubr.bf16.mxu0 %v962
        %1888 = vmatmul.mubr.bf16.gmra.mxu0 %v961
        %v1889 = vpop.f32.mrf.mxu0
        %v1890 = vadd.f32 %v1817, %v1889
        %v1891 = vpop.f32.mrf.mxu0
        %v1892 = vadd.f32 %v1819, %v1891
        %v1893 = vpop.f32.mrf.mxu0
        %v1894 = vadd.f32 %v1821, %v1893
        %v1895 = vpop.f32.mrf.mxu0
        %v1896 = vadd.f32 %v1823, %v1895
        %1897 = vmatprep.mubr.bf16.mxu0 %v966
        %1898 = vmatmul.mubr.bf16.gmra.mxu0 %v965
        %v1899 = vpop.f32.mrf.mxu0
        %v1900 = vadd.f32 %v1827, %v1899
        %v1901 = vpop.f32.mrf.mxu0
        %v1902 = vadd.f32 %v1829, %v1901
        %v1903 = vpop.f32.mrf.mxu0
        %v1904 = vadd.f32 %v1831, %v1903
        %v1905 = vpop.f32.mrf.mxu0
        %v1906 = vadd.f32 %v1833, %v1905
        %1907 = vmatprep.mubr.bf16.mxu0 %v970
        %1908 = vmatmul.mubr.bf16.gmra.mxu0 %v969
        %v1909 = vpop.f32.mrf.mxu0
        %v1910 = vadd.f32 %v1837, %v1909
        %v1911 = vpop.f32.mrf.mxu0
        %v1912 = vadd.f32 %v1839, %v1911
        %v1913 = vpop.f32.mrf.mxu0
        %v1914 = vadd.f32 %v1841, %v1913
        %v1915 = vpop.f32.mrf.mxu0
        %v1916 = vadd.f32 %v1843, %v1915
        %1917 = vmatprep.mubr.bf16.mxu0 %v974
        %1918 = vmatmul.mubr.bf16.gmra.mxu0 %v973
        %v1919 = vpop.f32.mrf.mxu0
        %v1920 = vadd.f32 %v1847, %v1919
        %v1921 = vpop.f32.mrf.mxu0
        %v1922 = vadd.f32 %v1849, %v1921
        %v1923 = vpop.f32.mrf.mxu0
        %v1924 = vadd.f32 %v1851, %v1923
        %v1925 = vpop.f32.mrf.mxu0
        %v1926 = vadd.f32 %v1853, %v1925
        %1927 = vdwg.mxu0
        %v1928 = vmax.f32 %v1744, 0.0
        %v1929 = vmax.f32 %v1746, 0.0
        %v1930 = vmax.f32 %v1890, 0.0
        %v1931 = vmax.f32 %v1892, 0.0
        %v1932 = vmax.f32 %v1748, 0.0
        %v1933 = vmax.f32 %v1750, 0.0
        %v1934 = vmax.f32 %v1894, 0.0
        %v1935 = vmax.f32 %v1896, 0.0
        %v1936 = vmax.f32 %v1754, 0.0
        %v1937 = vmax.f32 %v1756, 0.0
        %v1938 = vmax.f32 %v1900, 0.0
        %v1939 = vmax.f32 %v1902, 0.0
        %v1940 = vmax.f32 %v1758, 0.0
        %v1941 = vmax.f32 %v1760, 0.0
        %v1942 = vmax.f32 %v1904, 0.0
        %v1943 = vmax.f32 %v1906, 0.0
        %v1944 = vmax.f32 %v1764, 0.0
        %v1945 = vmax.f32 %v1766, 0.0
        %v1946 = vmax.f32 %v1910, 0.0
        %v1947 = vmax.f32 %v1912, 0.0
        %v1948 = vmax.f32 %v1768, 0.0
        %v1949 = vmax.f32 %v1770, 0.0
        %v1950 = vmax.f32 %v1914, 0.0
        %v1951 = vmax.f32 %v1916, 0.0
        %v1952 = vmax.f32 %v1774, 0.0
        %v1953 = vmax.f32 %v1776, 0.0
        %v1954 = vmax.f32 %v1920, 0.0
        %v1955 = vmax.f32 %v1922, 0.0
        %v1956 = vmax.f32 %v1778, 0.0
        %v1957 = vmax.f32 %v1780, 0.0
        %v1958 = vmax.f32 %v1924, 0.0
        %v1959 = vmax.f32 %v1926, 0.0
        %s1960 = scalar_lea.vmem [#allocation5], 2048
        %v1961 = vld [vmem:[%s1960] sm:$0xf]
        %v1962 = vld [vmem:[%s1960 + $0x10] sm:$0xf]
        %v1963 = vld [vmem:[%s1960 + $0x20] sm:$0xf]
        %v1964 = vld [vmem:[%s1960 + $0x30] sm:$0xf]
        %v1965 = vld [vmem:[%s1960 + $0x40] sm:$0xf]
        %v1966 = vld [vmem:[%s1960 + $0x50] sm:$0xf]
        %v1967 = vld [vmem:[%s1960 + $0x60] sm:$0xf]
        %v1968 = vld [vmem:[%s1960 + $0x70] sm:$0xf]
        %v1969 = vld [vmem:[%s1960 + $0x80] sm:$0xf]
        %v1970 = vld [vmem:[%s1960 + $0x90] sm:$0xf]
        %v1971 = vld [vmem:[%s1960 + $0xa0] sm:$0xf]
        %v1972 = vld [vmem:[%s1960 + $0xb0] sm:$0xf]
        %v1973 = vld [vmem:[%s1960 + $0xc0] sm:$0xf]
        %v1974 = vld [vmem:[%s1960 + $0xd0] sm:$0xf]
        %v1975 = vld [vmem:[%s1960 + $0xe0] sm:$0xf]
        %v1976 = vld [vmem:[%s1960 + $0xf0] sm:$0xf]
        %v1977 = vld [vmem:[%s1960 + $0x100] sm:$0xf]
        %v1978 = vld [vmem:[%s1960 + $0x110] sm:$0xf]
        %v1979 = vld [vmem:[%s1960 + $0x120] sm:$0xf]
        %v1980 = vld [vmem:[%s1960 + $0x130] sm:$0xf]
        %v1981 = vld [vmem:[%s1960 + $0x140] sm:$0xf]
        %v1982 = vld [vmem:[%s1960 + $0x150] sm:$0xf]
        %v1983 = vld [vmem:[%s1960 + $0x160] sm:$0xf]
        %v1984 = vld [vmem:[%s1960 + $0x170] sm:$0xf]
        %v1985 = vld [vmem:[%s1960 + $0x180] sm:$0xf]
        %v1986 = vld [vmem:[%s1960 + $0x190] sm:$0xf]
        %v1987 = vld [vmem:[%s1960 + $0x1a0] sm:$0xf]
        %v1988 = vld [vmem:[%s1960 + $0x1b0] sm:$0xf]
        %v1989 = vld [vmem:[%s1960 + $0x1c0] sm:$0xf]
        %v1990 = vld [vmem:[%s1960 + $0x1d0] sm:$0xf]
        %v1991 = vld [vmem:[%s1960 + $0x1e0] sm:$0xf]
        %v1992 = vld [vmem:[%s1960 + $0x1f0] sm:$0xf]
        %v1993 = vld [vmem:[%s1960 + $0x200] sm:$0xf]
        %v1994 = vld [vmem:[%s1960 + $0x210] sm:$0xf]
        %v1995 = vld [vmem:[%s1960 + $0x220] sm:$0xf]
        %v1996 = vld [vmem:[%s1960 + $0x230] sm:$0xf]
        %v1997 = vld [vmem:[%s1960 + $0x240] sm:$0xf]
        %v1998 = vld [vmem:[%s1960 + $0x250] sm:$0xf]
        %v1999 = vld [vmem:[%s1960 + $0x260] sm:$0xf]
        %v2000 = vld [vmem:[%s1960 + $0x270] sm:$0xf]
        %v2001 = vld [vmem:[%s1960 + $0x280] sm:$0xf]
        %v2002 = vld [vmem:[%s1960 + $0x290] sm:$0xf]
        %v2003 = vld [vmem:[%s1960 + $0x2a0] sm:$0xf]
        %v2004 = vld [vmem:[%s1960 + $0x2b0] sm:$0xf]
        %v2005 = vld [vmem:[%s1960 + $0x2c0] sm:$0xf]
        %v2006 = vld [vmem:[%s1960 + $0x2d0] sm:$0xf]
        %v2007 = vld [vmem:[%s1960 + $0x2e0] sm:$0xf]
        %v2008 = vld [vmem:[%s1960 + $0x2f0] sm:$0xf]
        %v2009 = vld [vmem:[%s1960 + $0x300] sm:$0xf]
        %v2010 = vld [vmem:[%s1960 + $0x310] sm:$0xf]
        %v2011 = vld [vmem:[%s1960 + $0x320] sm:$0xf]
        %v2012 = vld [vmem:[%s1960 + $0x330] sm:$0xf]
        %v2013 = vld [vmem:[%s1960 + $0x340] sm:$0xf]
        %v2014 = vld [vmem:[%s1960 + $0x350] sm:$0xf]
        %v2015 = vld [vmem:[%s1960 + $0x360] sm:$0xf]
        %v2016 = vld [vmem:[%s1960 + $0x370] sm:$0xf]
        %v2017 = vld [vmem:[%s1960 + $0x380] sm:$0xf]
        %v2018 = vld [vmem:[%s1960 + $0x390] sm:$0xf]
        %v2019 = vld [vmem:[%s1960 + $0x3a0] sm:$0xf]
        %v2020 = vld [vmem:[%s1960 + $0x3b0] sm:$0xf]
        %v2021 = vld [vmem:[%s1960 + $0x3c0] sm:$0xf]
        %v2022 = vld [vmem:[%s1960 + $0x3d0] sm:$0xf]
        %v2023 = vld [vmem:[%s1960 + $0x3e0] sm:$0xf]
        %v2024 = vld [vmem:[%s1960 + $0x3f0] sm:$0xf]
        %v2025 = vld [vmem:[#allocation7 + $0x2] sm:$0x1]
        %v2026 = vpack.c.bf16 %v1932, %v1928
        %v2027 = vpack.c.bf16 %v1933, %v1929
        %v2028 = vpack.c.bf16 %v1934, %v1930
        %v2029 = vpack.c.bf16 %v1935, %v1931
        %v2030 = vpack.c.bf16 %v1940, %v1936
        %v2031 = vpack.c.bf16 %v1941, %v1937
        %v2032 = vpack.c.bf16 %v1942, %v1938
        %v2033 = vpack.c.bf16 %v1943, %v1939
        %v2034 = vpack.c.bf16 %v1948, %v1944
        %v2035 = vpack.c.bf16 %v1949, %v1945
        %v2036 = vpack.c.bf16 %v1950, %v1946
        %v2037 = vpack.c.bf16 %v1951, %v1947
        %v2038 = vpack.c.bf16 %v1956, %v1952
        %v2039 = vpack.c.bf16 %v1957, %v1953
        %v2040 = vpack.c.bf16 %v1958, %v1954
        %v2041 = vpack.c.bf16 %v1959, %v1955
        %v2042 = vlaneseq
        %v2043 = vshrl.u32 %v2042, 7
        %v2044 = vsub.s32 0, %v2043
        %v2045 = vrot.slane %v2025, %v2044
        %v2110 = vunpack.c.l.b16 %v1961
        %v2111 = vunpack.c.l.b16 %v1962
        %v2112 = vunpack.c.l.b16 %v1963
        %v2113 = vunpack.c.l.b16 %v1964
        %v2114 = vunpack.c.l.b16 %v1965
        %v2115 = vunpack.c.l.b16 %v1966
        %v2116 = vunpack.c.l.b16 %v1967
        %v2117 = vunpack.c.l.b16 %v1968
        %v2118 = vunpack.c.l.b16 %v1969
        %v2119 = vunpack.c.l.b16 %v1970
        %v2120 = vunpack.c.l.b16 %v1971
        %v2121 = vunpack.c.l.b16 %v1972
        %v2122 = vunpack.c.l.b16 %v1973
        %v2123 = vunpack.c.l.b16 %v1974
        %v2124 = vunpack.c.l.b16 %v1975
        %v2125 = vunpack.c.l.b16 %v1976
        %v2126 = vunpack.c.l.b16 %v1977
        %v2127 = vunpack.c.l.b16 %v1978
        %v2128 = vunpack.c.l.b16 %v1979
        %v2129 = vunpack.c.l.b16 %v1980
        %v2130 = vunpack.c.l.b16 %v1981
        %v2131 = vunpack.c.l.b16 %v1982
        %v2132 = vunpack.c.l.b16 %v1983
        %v2133 = vunpack.c.l.b16 %v1984
        %v2134 = vunpack.c.l.b16 %v1985
        %v2135 = vunpack.c.l.b16 %v1986
        %v2136 = vunpack.c.l.b16 %v1987
        %v2137 = vunpack.c.l.b16 %v1988
        %v2138 = vunpack.c.l.b16 %v1989
        %v2139 = vunpack.c.l.b16 %v1990
        %v2140 = vunpack.c.l.b16 %v1991
        %v2141 = vunpack.c.l.b16 %v1992
        %v2142 = vunpack.c.l.b16 %v1993
        %v2143 = vunpack.c.l.b16 %v1994
        %v2144 = vunpack.c.l.b16 %v1995
        %v2145 = vunpack.c.l.b16 %v1996
        %v2146 = vunpack.c.l.b16 %v1997
        %v2147 = vunpack.c.l.b16 %v1998
        %v2148 = vunpack.c.l.b16 %v1999
        %v2149 = vunpack.c.l.b16 %v2000
        %v2150 = vunpack.c.l.b16 %v2001
        %v2151 = vunpack.c.l.b16 %v2002
        %v2152 = vunpack.c.l.b16 %v2003
        %v2153 = vunpack.c.l.b16 %v2004
        %v2154 = vunpack.c.l.b16 %v2005
        %v2155 = vunpack.c.l.b16 %v2006
        %v2156 = vunpack.c.l.b16 %v2007
        %v2157 = vunpack.c.l.b16 %v2008
        %v2158 = vunpack.c.l.b16 %v2009
        %v2159 = vunpack.c.l.b16 %v2010
        %v2160 = vunpack.c.l.b16 %v2011
        %v2161 = vunpack.c.l.b16 %v2012
        %v2162 = vunpack.c.l.b16 %v2013
        %v2163 = vunpack.c.l.b16 %v2014
        %v2164 = vunpack.c.l.b16 %v2015
        %v2165 = vunpack.c.l.b16 %v2016
        %v2166 = vunpack.c.l.b16 %v2017
        %v2167 = vunpack.c.l.b16 %v2018
        %v2168 = vunpack.c.l.b16 %v2019
        %v2169 = vunpack.c.l.b16 %v2020
        %v2170 = vunpack.c.l.b16 %v2021
        %v2171 = vunpack.c.l.b16 %v2022
        %v2172 = vunpack.c.l.b16 %v2023
        %v2173 = vunpack.c.l.b16 %v2024
        %v2174 = vpack.c.b16 %v2111, %v2110
        %v2175 = vpack.c.b16 %v2113, %v2112
        %v2176 = vpack.c.b16 %v2115, %v2114
        %v2177 = vpack.c.b16 %v2117, %v2116
        %v2178 = vpack.c.b16 %v2119, %v2118
        %v2179 = vpack.c.b16 %v2121, %v2120
        %v2180 = vpack.c.b16 %v2123, %v2122
        %v2181 = vpack.c.b16 %v2125, %v2124
        %v2182 = vpack.c.b16 %v2127, %v2126
        %v2183 = vpack.c.b16 %v2129, %v2128
        %v2184 = vpack.c.b16 %v2131, %v2130
        %v2185 = vpack.c.b16 %v2133, %v2132
        %v2186 = vpack.c.b16 %v2135, %v2134
        %v2187 = vpack.c.b16 %v2137, %v2136
        %v2188 = vpack.c.b16 %v2139, %v2138
        %v2189 = vpack.c.b16 %v2141, %v2140
        %v2190 = vpack.c.b16 %v2143, %v2142
        %v2191 = vpack.c.b16 %v2145, %v2144
        %v2192 = vpack.c.b16 %v2147, %v2146
        %v2193 = vpack.c.b16 %v2149, %v2148
        %v2194 = vpack.c.b16 %v2151, %v2150
        %v2195 = vpack.c.b16 %v2153, %v2152
        %v2196 = vpack.c.b16 %v2155, %v2154
        %v2197 = vpack.c.b16 %v2157, %v2156
        %v2198 = vpack.c.b16 %v2159, %v2158
        %v2199 = vpack.c.b16 %v2161, %v2160
        %v2200 = vpack.c.b16 %v2163, %v2162
        %v2201 = vpack.c.b16 %v2165, %v2164
        %v2202 = vpack.c.b16 %v2167, %v2166
        %v2203 = vpack.c.b16 %v2169, %v2168
        %v2204 = vpack.c.b16 %v2171, %v2170
        %v2205 = vpack.c.b16 %v2173, %v2172
        %2238 = vmatprep.subr.bf16.mxu0 0
        %2239 = vmatpush1.bf16.msra.mxu0 %v2181
        %2240 = vmatprep.subr.bf16.mxu0 0
        %2241 = vmatpush1.bf16.msra.mxu0 %v2180
        %2242 = vmatprep.subr.bf16.mxu0 0
        %2243 = vmatpush1.bf16.msra.mxu0 %v2179
        %2244 = vmatprep.subr.bf16.mxu0 0
        %2245 = vmatpush1.bf16.msra.mxu0 %v2178
        %2246 = vmatprep.subr.bf16.mxu0 0
        %2247 = vmatpush1.bf16.msra.mxu0 %v2177
        %2248 = vmatprep.subr.bf16.mxu0 0
        %2249 = vmatpush1.bf16.msra.mxu0 %v2176
        %2250 = vmatprep.subr.bf16.mxu0 0
        %2251 = vmatpush1.bf16.msra.mxu0 %v2175
        %2252 = vmatprep.subr.bf16.mxu0 0
        %2253 = vmatpush1.bf16.msra.mxu0 %v2174
        %2254 = vmatprep.subr.bf16.mxu0 0
        %2255 = vmatpush2.bf16.msra.mxu0 %v2189
        %2256 = vmatprep.subr.bf16.mxu0 0
        %2257 = vmatpush2.bf16.msra.mxu0 %v2188
        %2258 = vmatprep.subr.bf16.mxu0 0
        %2259 = vmatpush2.bf16.msra.mxu0 %v2187
        %2260 = vmatprep.subr.bf16.mxu0 0
        %2261 = vmatpush2.bf16.msra.mxu0 %v2186
        %2262 = vmatprep.subr.bf16.mxu0 0
        %2263 = vmatpush2.bf16.msra.mxu0 %v2185
        %2264 = vmatprep.subr.bf16.mxu0 0
        %2265 = vmatpush2.bf16.msra.mxu0 %v2184
        %2266 = vmatprep.subr.bf16.mxu0 0
        %2267 = vmatpush2.bf16.msra.mxu0 %v2183
        %2268 = vmatprep.subr.bf16.mxu0 0
        %2269 = vmatpush2.bf16.msra.mxu0 %v2182
        %2270 = vmatprep.mubr.bf16.mxu0 %v2027
        %2271 = vmatmul.mubr.bf16.gmra.mxu0 %v2026
        %v2272 = vpop.f32.mrf.mxu0
        %v2273 = vadd.f32 %v2045, %v2272
        %v2274 = vpop.f32.mrf.mxu0
        %v2275 = vpop.f32.mrf.mxu0
        %v2276 = vadd.f32 %v2045, %v2275
        %v2277 = vpop.f32.mrf.mxu0
        %2278 = vmatprep.mubr.bf16.mxu0 %v2031
        %2279 = vmatmul.mubr.bf16.gmra.mxu0 %v2030
        %v2280 = vpop.f32.mrf.mxu0
        %v2281 = vadd.f32 %v2045, %v2280
        %v2282 = vpop.f32.mrf.mxu0
        %v2283 = vpop.f32.mrf.mxu0
        %v2284 = vadd.f32 %v2045, %v2283
        %v2285 = vpop.f32.mrf.mxu0
        %2286 = vmatprep.mubr.bf16.mxu0 %v2035
        %2287 = vmatmul.mubr.bf16.gmra.mxu0 %v2034
        %v2288 = vpop.f32.mrf.mxu0
        %v2289 = vadd.f32 %v2045, %v2288
        %v2290 = vpop.f32.mrf.mxu0
        %v2291 = vpop.f32.mrf.mxu0
        %v2292 = vadd.f32 %v2045, %v2291
        %v2293 = vpop.f32.mrf.mxu0
        %2294 = vmatprep.mubr.bf16.mxu0 %v2039
        %2295 = vmatmul.mubr.bf16.gmra.mxu0 %v2038
        %v2296 = vpop.f32.mrf.mxu0
        %v2297 = vadd.f32 %v2045, %v2296
        %v2298 = vpop.f32.mrf.mxu0
        %v2299 = vpop.f32.mrf.mxu0
        %v2300 = vadd.f32 %v2045, %v2299
        %v2301 = vpop.f32.mrf.mxu0
        %2302 = vdwg.mxu0
        %2303 = vmatprep.subr.bf16.mxu0 0
        %2304 = vmatpush1.bf16.msra.mxu0 %v2197
        %2305 = vmatprep.subr.bf16.mxu0 0
        %2306 = vmatpush1.bf16.msra.mxu0 %v2196
        %2307 = vmatprep.subr.bf16.mxu0 0
        %2308 = vmatpush1.bf16.msra.mxu0 %v2195
        %2309 = vmatprep.subr.bf16.mxu0 0
        %2310 = vmatpush1.bf16.msra.mxu0 %v2194
        %2311 = vmatprep.subr.bf16.mxu0 0
        %2312 = vmatpush1.bf16.msra.mxu0 %v2193
        %2313 = vmatprep.subr.bf16.mxu0 0
        %2314 = vmatpush1.bf16.msra.mxu0 %v2192
        %2315 = vmatprep.subr.bf16.mxu0 0
        %2316 = vmatpush1.bf16.msra.mxu0 %v2191
        %2317 = vmatprep.subr.bf16.mxu0 0
        %2318 = vmatpush1.bf16.msra.mxu0 %v2190
        %2319 = vmatprep.subr.bf16.mxu0 0
        %2320 = vmatpush2.bf16.msra.mxu0 %v2205
        %2321 = vmatprep.subr.bf16.mxu0 0
        %2322 = vmatpush2.bf16.msra.mxu0 %v2204
        %2323 = vmatprep.subr.bf16.mxu0 0
        %2324 = vmatpush2.bf16.msra.mxu0 %v2203
        %2325 = vmatprep.subr.bf16.mxu0 0
        %2326 = vmatpush2.bf16.msra.mxu0 %v2202
        %2327 = vmatprep.subr.bf16.mxu0 0
        %2328 = vmatpush2.bf16.msra.mxu0 %v2201
        %2329 = vmatprep.subr.bf16.mxu0 0
        %2330 = vmatpush2.bf16.msra.mxu0 %v2200
        %2331 = vmatprep.subr.bf16.mxu0 0
        %2332 = vmatpush2.bf16.msra.mxu0 %v2199
        %2333 = vmatprep.subr.bf16.mxu0 0
        %2334 = vmatpush2.bf16.msra.mxu0 %v2198
        %2335 = vmatprep.mubr.bf16.mxu0 %v2029
        %2336 = vmatmul.mubr.bf16.gmra.mxu0 %v2028
        %v2337 = vpop.f32.mrf.mxu0
        %v2338 = vadd.f32 %v2273, %v2337
        %v2339 = vpop.f32.mrf.mxu0
        %v2340 = vpop.f32.mrf.mxu0
        %v2341 = vadd.f32 %v2276, %v2340
        %v2342 = vpop.f32.mrf.mxu0
        %2343 = vmatprep.mubr.bf16.mxu0 %v2033
        %2344 = vmatmul.mubr.bf16.gmra.mxu0 %v2032
        %v2345 = vpop.f32.mrf.mxu0
        %v2346 = vadd.f32 %v2281, %v2345
        %v2347 = vpop.f32.mrf.mxu0
        %v2348 = vpop.f32.mrf.mxu0
        %v2349 = vadd.f32 %v2284, %v2348
        %v2350 = vpop.f32.mrf.mxu0
        %2351 = vmatprep.mubr.bf16.mxu0 %v2037
        %2352 = vmatmul.mubr.bf16.gmra.mxu0 %v2036
        %v2353 = vpop.f32.mrf.mxu0
        %v2354 = vadd.f32 %v2289, %v2353
        %v2355 = vpop.f32.mrf.mxu0
        %v2356 = vpop.f32.mrf.mxu0
        %v2357 = vadd.f32 %v2292, %v2356
        %v2358 = vpop.f32.mrf.mxu0
        %2359 = vmatprep.mubr.bf16.mxu0 %v2041
        %2360 = vmatmul.mubr.bf16.gmra.mxu0 %v2040
        %v2361 = vpop.f32.mrf.mxu0
        %v2362 = vadd.f32 %v2297, %v2361
        %v2363 = vpop.f32.mrf.mxu0
        %v2364 = vpop.f32.mrf.mxu0
        %v2365 = vadd.f32 %v2300, %v2364
        %v2366 = vpop.f32.mrf.mxu0
        %2367 = vdwg.mxu0
        %v2368 = vmax.f32 %v2338, -1.0
        %v2369 = vmax.f32 %v2341, -1.0
        %v2370 = vmax.f32 %v2346, -1.0
        %v2371 = vmax.f32 %v2349, -1.0
        %v2372 = vmax.f32 %v2354, -1.0
        %v2373 = vmax.f32 %v2357, -1.0
        %v2374 = vmax.f32 %v2362, -1.0
        %v2375 = vmax.f32 %v2365, -1.0
        %v2376 = vmin.f32 %v2368, 1.0
        %v2377 = vmin.f32 %v2369, 1.0
        %v2378 = vmin.f32 %v2370, 1.0
        %v2379 = vmin.f32 %v2371, 1.0
        %v2380 = vmin.f32 %v2372, 1.0
        %v2381 = vmin.f32 %v2373, 1.0
        %v2382 = vmin.f32 %v2374, 1.0
        %v2383 = vmin.f32 %v2375, 1.0
        %2384 = vst [vmem:[%s216] sm:$0xff] %v2376
        %2385 = vst [vmem:[%s216 + $0x8] sm:$0xff] %v2377
        %2386 = vst [vmem:[%s216 + $0x10] sm:$0xff] %v2378
        %2387 = vst [vmem:[%s216 + $0x18] sm:$0xff] %v2379
        %2388 = vst [vmem:[%s216 + $0x20] sm:$0xff] %v2380
        %2389 = vst [vmem:[%s216 + $0x28] sm:$0xff] %v2381
        %2390 = vst [vmem:[%s216 + $0x30] sm:$0xff] %v2382
        %2391 = vst [vmem:[%s216 + $0x38] sm:$0xff] %v2383
        %s2392 = sand.u32 %s97, 1
        %s2393 = scalar_lea.sflag [#allocation4], %s2392
        %s2394 = sand.u32 %s97, 1
        %s2395 = smul.addr %s2394, 64
        %s2396 = scalar_lea.vmem [#allocation8], %s2395
        // Predicated region
        $region45: #{tpu_custom_call.1} parent=31 // pred_check
          %p2397 = pneg %p107
        $region46: #{tpu_custom_call.1} parent=31 // pred_check_branch
          %2399 = sbr.rel (%p2397) target = $region48
        $region47: #{tpu_custom_call.1} parent=31 // pred_region
          %s2400 = smul.u32 8, %s21
          %s2402 = ssub.s32 1024, 1024
          %2403 = vsyncadd %s2393, %s2402
          %s2404 = smul.addr %s2400, 128
          %s2405 = scalar_lea.hbm %s3, %s2404
          %s2406 = sshll.u32 %s2396, 4
          %s2407 = int_to_ptr.vmem [resolvable:$true] %s2406
          %2412 = dma.vmem_to_hbm [thread:$0]  %s2407, 1024, %s2405, %s2393, 128, 128, 8
        $region48: #{tpu_custom_call.1} parent=31 // pred_fallthru
          _
      $region32: #{tpu_custom_call.1} parent=5 // pred_fallthru
        _
      %p2413 = scmp.le.s32.totalorder 2, %s16
      // Predicated region
      $region49: #{tpu_custom_call.1} parent=5 // pred_check
        %p2414 = pneg %p2413
      $region50: #{tpu_custom_call.1} parent=5 // pred_check_branch
        %2416 = sbr.rel (%p2414) target = $region52
      $region51: #{tpu_custom_call.1} parent=5 // pred_region
        %s2417 = ssub.s32 %s16, 2
        // Predicated region
        $region53: #{tpu_custom_call.1} parent=51 // pred_check
          %p2418 = pneg %p113
        $region54: #{tpu_custom_call.1} parent=51 // pred_check_branch
          %2420 = sbr.rel (%p2418) target = $region56
        $region55: #{tpu_custom_call.1} parent=51 // pred_region
          %s2421 = sand.u32 %s98, 1
          %s2422 = scalar_lea.sflag [#allocation4], %s2421
          %s2423 = sand.u32 %s98, 1
          %s2424 = smul.addr %s2423, 64
          %s2425 = scalar_lea.vmem [#allocation8], %s2424
          %2426 = dma.done %s2422, 1024
        $region56: #{tpu_custom_call.1} parent=51 // pred_fallthru
          _
      $region52: #{tpu_custom_call.1} parent=5 // pred_fallthru
        _
    $region6: #{tpu_custom_call.1} parent=1 // loop_footer
      %s20 = sadd.s32 1, %s16
    $region7: #{tpu_custom_call.1} parent=1 // loop_footer_branch
      %15 = sbr.rel target = $region3
    $region8: #{tpu_custom_call.1} parent=1 // loop_exit
      _
    %2427 = vsyncpa [#allocation3], 1
    %s2428 = scalar_lea.sflag [#allocation3], 1
    %2429 = vsyncpa %s2428, 1
    %2430 = vsyncpa [#allocation6], 1
    %2431 = vsyncpa [#allocation4], 1
    %s2432 = scalar_lea.sflag [#allocation4], 1
    %2433 = vsyncpa %s2432, 1

</llo_original>
